<compile_context>
chip_gen: v5e
topology: v5e:2x2
jax: 0.10.0
libtpu: 0.0.40
codegen_flags: <defaults>
</compile_context>

<pallas_src>
import numpy as np
import jax
import jax.numpy as jnp
from jax.experimental import pallas as pl
from jax.experimental.pallas import tpu as pltpu


# ---------------------------------------------------------------------------
# Kernel body (shared by the head-fused and per-head paths)
# ---------------------------------------------------------------------------
def _mml_kernel(x_ref, c_ref, rsel_ref, tsel_ref, mx_ref, mc_ref, w_ref, o_ref):
    """Three matmuls + one elementwise multiply.

    x_ref    : (TB, Fx)    x rows (heads stacked along lanes in the fused path)
    c_ref    : (TB, Fc)    cond rows
    rsel_ref : (Fx, KT)    0/1 selector: repeats each x feature (C+1) times
    tsel_ref : (Fc, KT)    0/1 selector: tiles cond features (I+1) times
    mx_ref   : (1,  KT)    additive mask = contribution of the implicit x "ones" feature
    mc_ref   : (1,  KT)    additive mask = contribution of the implicit cond "ones" feature
    w_ref    : (KT, No)    generated-weight generator (bias folded in, zero row padding)
    o_ref    : (TB, No)    output rows
    """
    f32 = jnp.float32
    xa_rep = jnp.dot(x_ref[...], rsel_ref[...], preferred_element_type=f32) + mx_ref[...]
    ca_til = jnp.dot(c_ref[...], tsel_ref[...], preferred_element_type=f32) + mc_ref[...]
    z = (xa_rep * ca_til).astype(w_ref.dtype)          # Z[b, j*(C+1)+c'] outer product
    y = jnp.dot(z, w_ref[...], preferred_element_type=f32)
    o_ref[...] = y.astype(o_ref.dtype)


# ---------------------------------------------------------------------------
# Heuristics / helpers
# ---------------------------------------------------------------------------
def _num_tensorcores():
    """2 for chips whose grid is sharded across TensorCores (v4/v5p megacore, v7x), else 1."""
    try:
        kind = jax.devices()[0].device_kind.lower()
    except Exception:
        return 1
    return 2 if any(t in kind for t in ("v7", "v4", "v5p")) else 1


def _round_up(n, m):
    return ((n + m - 1) // m) * m


def _pick_batch_tile(B, n_tc, row_bytes, budget_bytes=24 << 20):
    """Largest batch tile that fits the VMEM budget; split only when >1 TensorCore."""
    cap = max(8, budget_bytes // max(row_bytes, 1))
    if n_tc <= 1 and B <= cap:
        return B                                   # single grid step: no per-step overhead
    for cand in (1024, 512, 256, 128, 64, 32, 16, 8):
        if cand <= cap and B % cand == 0 and B // cand >= max(n_tc, 1):
            return cand
    return B                                       # fallback: one full block


def _vmem_limit_bytes(estimate):
    """Generous headroom, clamped to the smallest physical VMEM across targets (v7x 64 MiB)."""
    return int(min(64 << 20, max(2 * estimate + (4 << 20), 16 << 20)))


def _const_spec_factory(single_buffer):
    """BlockSpec maker for grid-invariant operands (optionally single-buffered)."""
    if not single_buffer:
        return pl.BlockSpec
    def make(shape, index_map):
        return pl.BlockSpec(shape, index_map, pipeline_mode=pl.Buffered(1))
    return make


def _per_head_selectors(I, C):
    """Per-head constant 0/1 selectors with the implicit-ones rows split off as masks."""
    r1 = np.kron(np.eye(I + 1), np.ones((1, C + 1)))     # (I+1, K): row j -> cols j*(C+1)+*
    t1 = np.kron(np.ones((1, I + 1)), np.eye(C + 1))     # (C+1, K): row c -> cols *(C+1)+c
    return r1[:I], t1[:C], r1[I:I + 1], t1[C:C + 1]       # (I,K), (C,K), (1,K), (1,K)


def _rearrange_cond_weight(cond_weight, cond_bias, H, I, C, O):
    """(H, O*(I+1), C) + (H, O*(I+1)) -> (H, K, O) with bias folded as the extra cond col."""
    K = (I + 1) * (C + 1)
    cw_r = cond_weight.reshape(H, O, I + 1, C).transpose(0, 2, 3, 1)    # (H, I+1, C, O)
    cb_r = cond_bias.reshape(H, O, I + 1).transpose(0, 2, 1)            # (H, I+1, O)
    cw_aug = jnp.concatenate([cw_r, cb_r[:, :, None, :]], axis=2)       # (H, I+1, C+1, O)
    return cw_aug.reshape(H, K, O)


# ---------------------------------------------------------------------------
# Path 1: small H — heads fused along the lane axis (block-diagonal weights)
# ---------------------------------------------------------------------------
def _fused_heads_call(x, cond, cw_flat, r1x, t1c, mx1, mc1,
                      H, B, I, C, O, K, cdt, io_dtype, n_tc):
    KT = _round_up(H * K, 128)                     # pad fused contraction width to 128 lanes
    itemsize = np.dtype(cdt).itemsize

    # lane-stacked inputs (heads along lanes); no ones-concat — folded into the masks
    x_l = x.astype(cdt).transpose(1, 0, 2).reshape(B, H * I)
    c_l = cond.astype(cdt).transpose(1, 0, 2).reshape(B, H * C)

    # constant 0/1 selectors, block-diagonal over heads, zero-padded to KT lanes
    eye_h = np.eye(H)
    r_sel = np.zeros((H * I, KT)); r_sel[:, :H * K] = np.kron(eye_h, r1x)
    t_sel = np.zeros((H * C, KT)); t_sel[:, :H * K] = np.kron(eye_h, t1c)
    mx = np.zeros((1, KT)); mx[:, :H * K] = np.tile(mx1, (1, H))
    mc = np.zeros((1, KT)); mc[:, :H * K] = np.tile(mc1, (1, H))
    r_sel = jnp.asarray(r_sel, cdt); t_sel = jnp.asarray(t_sel, cdt)
    mx = jnp.asarray(mx, cdt); mc = jnp.asarray(mc, cdt)

    # block-diagonal generated-weight generator, rows zero-padded to KT
    cw_bd = jnp.einsum('hko,hg->hkgo', cw_flat, jnp.eye(H, dtype=cdt)).reshape(H * K, H * O)
    cw_bd = jnp.pad(cw_bd, ((0, KT - H * K), (0, 0)))

    # batch tile & explicit VMEM budget
    row_bytes = 2 * (H * I + H * C + H * O) * itemsize + 3 * KT * 4    # pipelined I/O + f32 intermediates
    tb = _pick_batch_tile(B, n_tc, row_bytes)
    const_bytes = ((H * I + H * C + 2) * KT + KT * H * O) * itemsize
    vmem_limit = _vmem_limit_bytes(tb * row_bytes + const_bytes)

    def run(single_buffer_consts):
        cspec = _const_spec_factory(single_buffer_consts)
        return pl.pallas_call(
            _mml_kernel,
            out_shape=jax.ShapeDtypeStruct((B, H * O), io_dtype),
            grid=(B // tb,),
            in_specs=[
                pl.BlockSpec((tb, H * I), lambda i: (i, 0)),
                pl.BlockSpec((tb, H * C), lambda i: (i, 0)),
                cspec((H * I, KT), lambda i: (0, 0)),
                cspec((H * C, KT), lambda i: (0, 0)),
                cspec((1, KT), lambda i: (0, 0)),
                cspec((1, KT), lambda i: (0, 0)),
                cspec((KT, H * O), lambda i: (0, 0)),
            ],
            out_specs=pl.BlockSpec((tb, H * O), lambda i: (i, 0)),
            compiler_params=pltpu.CompilerParams(
                dimension_semantics=("parallel",),
                vmem_limit_bytes=vmem_limit),
        )(x_l, c_l, r_sel, t_sel, mx, mc, cw_bd)

    try:
        return run(True)       # single-buffer the grid-invariant operands (VMEM win)
    except Exception:
        return run(False)      # fall back if this jax build rejects Buffered(1)


# ---------------------------------------------------------------------------
# Path 2: large H — O(H) scaling, grid axis over heads (no H^2 block-diagonal operands)
# ---------------------------------------------------------------------------
def _per_head_call(x, cond, cw_flat, r1x, t1c, mx1, mc1,
                   H, B, I, C, O, K, cdt, io_dtype, n_tc):
    KP = _round_up(K, 128)
    itemsize = np.dtype(cdt).itemsize

    x_c = x.astype(cdt)                            # (H, B, I) used as-is: no transpose/concat
    c_c = cond.astype(cdt)                         # (H, B, C)
    r_sel = jnp.asarray(np.pad(r1x, ((0, 0), (0, KP - K))), cdt)     # (I, KP)
    t_sel = jnp.asarray(np.pad(t1c, ((0, 0), (0, KP - K))), cdt)     # (C, KP)
    mx = jnp.asarray(np.pad(mx1, ((0, 0), (0, KP - K))), cdt)        # (1, KP)
    mc = jnp.asarray(np.pad(mc1, ((0, 0), (0, KP - K))), cdt)        # (1, KP)
    cw_p = jnp.pad(cw_flat, ((0, 0), (0, KP - K), (0, 0)))           # (H, KP, O)

    row_bytes = 2 * (I + C + O) * itemsize + 3 * KP * 4
    tb = _pick_batch_tile(B, n_tc, row_bytes)
    const_bytes = ((I + C + 2) * KP + 2 * KP * O) * itemsize         # cw slice double-buffered
    vmem_limit = _vmem_limit_bytes(tb * row_bytes + const_bytes)

    def run(single_buffer_consts):
        cspec = _const_spec_factory(single_buffer_consts)
        return pl.pallas_call(
            _mml_kernel,
            out_shape=jax.ShapeDtypeStruct((H, B, O), io_dtype),
            grid=(H, B // tb),
            in_specs=[
                pl.BlockSpec((None, tb, I), lambda h, i: (h, i, 0)),
                pl.BlockSpec((None, tb, C), lambda h, i: (h, i, 0)),
                cspec((I, KP), lambda h, i: (0, 0)),
                cspec((C, KP), lambda h, i: (0, 0)),
                cspec((1, KP), lambda h, i: (0, 0)),
                cspec((1, KP), lambda h, i: (0, 0)),
                pl.BlockSpec((None, KP, O), lambda h, i: (h, 0, 0)),  # re-fetched per head only
            ],
            out_specs=pl.BlockSpec((None, tb, O), lambda h, i: (h, i, 0)),
            compiler_params=pltpu.CompilerParams(
                dimension_semantics=("parallel", "parallel"),
                vmem_limit_bytes=vmem_limit),
        )(x_c, c_c, r_sel, t_sel, mx, mc, cw_p)

    try:
        return run(True)
    except Exception:
        return run(False)


# ---------------------------------------------------------------------------
# Public wrapper — matches MetaMultiLinear.forward
# ---------------------------------------------------------------------------
def meta_multi_linear(x, cond, cond_weight, cond_bias, *,
                      compute_dtype=None, head_fused=None, out_layout="hbo"):
    """x: (H,B,I), cond: (H,B,C), cond_weight: (H, O*(I+1), C), cond_bias: (H, O*(I+1)).

    Returns (H, B, O) (out_layout="hbo", module semantics) or the lane-dense (B, H*O)
    slab (out_layout="b_ho", skips the final transpose for consumers that can take it).
    compute_dtype=jnp.bfloat16 runs the matmuls in bf16 with f32 accumulation (opt-in;
    loosens achievable tolerance to ~1e-2).
    """
    H, B, I = x.shape
    C = cond.shape[-1]
    P = cond_weight.shape[1]
    O = P // (I + 1)
    assert O * (I + 1) == P
    K = (I + 1) * (C + 1)

    io_dtype = x.dtype
    cdt = compute_dtype if compute_dtype is not None else io_dtype
    n_tc = _num_tensorcores()
    if head_fused is None:
        head_fused = H <= 8        # block-diagonal fusion cost scales ~H^2; switch beyond that

    r1x, t1c, mx1, mc1 = _per_head_selectors(I, C)
    cw_flat = _rearrange_cond_weight(cond_weight, cond_bias, H, I, C, O).astype(cdt)

    if head_fused:
        out_slab = _fused_heads_call(x, cond, cw_flat, r1x, t1c, mx1, mc1,
                                     H, B, I, C, O, K, cdt, io_dtype, n_tc)
        if out_layout == "b_ho":
            return out_slab
        return out_slab.reshape(B, H, O).transpose(1, 0, 2)

    out = _per_head_call(x, cond, cw_flat, r1x, t1c, mx1, mc1,
                         H, B, I, C, O, K, cdt, io_dtype, n_tc)
    if out_layout == "b_ho":
        return out.transpose(1, 0, 2).reshape(B, H * O)
    return out


def meta_multi_linear_ref(x, cond, cond_weight, cond_bias):
    """Pure-JAX reference mirroring the PyTorch forward exactly."""
    H, B, I = x.shape
    P = cond_weight.shape[1]
    O = P // (I + 1)
    weight = jnp.einsum('hbc,hpc->hbp', cond, cond_weight) + cond_bias[:, None, :]
    weight = weight.reshape(H, B, O, I + 1)
    x_aug = jnp.concatenate([x, jnp.ones((H, B, 1), x.dtype)], axis=-1)
    return jnp.einsum('hbj,hboj->hbo', x_aug, weight)


if __name__ == "__main__":
    def _run_case(H, I, C, O, B, seed):
        P = O * (I + 1)
        key = jax.random.PRNGKey(seed)
        k_x, k_cond, k_w, k_b = jax.random.split(key, 4)
        bound = 1.0 / np.sqrt(C)
        cond_weight = jax.random.uniform(k_w, (H, P, C), jnp.float32, -bound, bound)
        cond_bias = jax.random.uniform(k_b, (H, P), jnp.float32, -bound, bound)
        x = jax.random.normal(k_x, (H, B, I), jnp.float32)
        cond = jax.random.normal(k_cond, (H, B, C), jnp.float32)

        out = jax.block_until_ready(meta_multi_linear(x, cond, cond_weight, cond_bias))
        ref = jax.block_until_ready(meta_multi_linear_ref(x, cond, cond_weight, cond_bias))
        np.testing.assert_allclose(np.asarray(out), np.asarray(ref), rtol=1e-4, atol=1e-4)

    # Small shapes consistent with the module.
    _run_case(H=4, I=8, C=16, O=32, B=64, seed=0)    # head-fused path (lane-dense H*O = 128)
    _run_case(H=16, I=8, C=16, O=32, B=64, seed=1)   # O(H) per-head path (large head count)
    print("KERNEL_OK")
</pallas_src>

<mosaic_0001>
module attributes {stable_mosaic.version = 11 : i64} {
  func.func @_mml_kernel(%arg0: i32, %arg1: memref<64x32xf32, #tpu.memory_space<vmem>>, %arg2: memref<64x64xf32, #tpu.memory_space<vmem>>, %arg3: memref<32x640xf32, #tpu.memory_space<vmem>>, %arg4: memref<64x640xf32, #tpu.memory_space<vmem>>, %arg5: memref<1x640xf32, #tpu.memory_space<vmem>>, %arg6: memref<1x640xf32, #tpu.memory_space<vmem>>, %arg7: memref<640x128xf32, #tpu.memory_space<vmem>>, %arg8: memref<64x128xf32, #tpu.memory_space<vmem>>) attributes {dimension_semantics = [#tpu.dimension_semantics<parallel>], iteration_bounds = array<i64: 1>, scalar_prefetch = 0 : i64, scratch_operands = 0 : i64, tpu.core_type = #tpu.core_type<tc>, window_params = [{transform_indices = @transform_0, window_bounds = array<i64: 64, 32>}, {transform_indices = @transform_1, window_bounds = array<i64: 64, 64>}, {pipeline_mode = #tpu.pipeline_mode<synchronous>, transform_indices = @transform_2, window_bounds = array<i64: 32, 640>}, {pipeline_mode = #tpu.pipeline_mode<synchronous>, transform_indices = @transform_3, window_bounds = array<i64: 64, 640>}, {pipeline_mode = #tpu.pipeline_mode<synchronous>, transform_indices = @transform_4, window_bounds = array<i64: 1, 640>}, {pipeline_mode = #tpu.pipeline_mode<synchronous>, transform_indices = @transform_5, window_bounds = array<i64: 1, 640>}, {pipeline_mode = #tpu.pipeline_mode<synchronous>, transform_indices = @transform_6, window_bounds = array<i64: 640, 128>}, {transform_indices = @transform_7, window_bounds = array<i64: 64, 128>}]} {
    %c0 = arith.constant 0 : index
    %c0_0 = arith.constant 0 : index
    %0 = vector.load %arg1[%c0, %c0_0] : memref<64x32xf32, #tpu.memory_space<vmem>>, vector<64x32xf32>
    %c0_1 = arith.constant 0 : index
    %c0_2 = arith.constant 0 : index
    %1 = vector.load %arg3[%c0_1, %c0_2] : memref<32x640xf32, #tpu.memory_space<vmem>>, vector<32x640xf32>
    %cst = arith.constant dense<0.000000e+00> : vector<64x640xf32>
    %2 = tpu.matmul %0, %1, %cst {dimension_numbers = #tpu.dot_dimension_numbers<[1], [0], [0], [1], [0, 0, 1, 1], [], []>} : vector<64x32xf32>, vector<32x640xf32>, vector<64x640xf32> -> vector<64x640xf32>
    %c0_3 = arith.constant 0 : index
    %c0_4 = arith.constant 0 : index
    %3 = vector.load %arg5[%c0_3, %c0_4] : memref<1x640xf32, #tpu.memory_space<vmem>>, vector<1x640xf32>
    %4 = vector.broadcast %3 : vector<1x640xf32> to vector<64x640xf32>
    %5 = arith.addf %2, %4 : vector<64x640xf32>
    %c0_5 = arith.constant 0 : index
    %c0_6 = arith.constant 0 : index
    %6 = vector.load %arg2[%c0_5, %c0_6] : memref<64x64xf32, #tpu.memory_space<vmem>>, vector<64x64xf32>
    %c0_7 = arith.constant 0 : index
    %c0_8 = arith.constant 0 : index
    %7 = vector.load %arg4[%c0_7, %c0_8] : memref<64x640xf32, #tpu.memory_space<vmem>>, vector<64x640xf32>
    %cst_9 = arith.constant dense<0.000000e+00> : vector<64x640xf32>
    %8 = tpu.matmul %6, %7, %cst_9 {dimension_numbers = #tpu.dot_dimension_numbers<[1], [0], [0], [1], [0, 0, 1, 1], [], []>} : vector<64x64xf32>, vector<64x640xf32>, vector<64x640xf32> -> vector<64x640xf32>
    %c0_10 = arith.constant 0 : index
    %c0_11 = arith.constant 0 : index
    %9 = vector.load %arg6[%c0_10, %c0_11] : memref<1x640xf32, #tpu.memory_space<vmem>>, vector<1x640xf32>
    %10 = vector.broadcast %9 : vector<1x640xf32> to vector<64x640xf32>
    %11 = arith.addf %8, %10 : vector<64x640xf32>
    %12 = arith.mulf %5, %11 : vector<64x640xf32>
    %c0_12 = arith.constant 0 : index
    %c0_13 = arith.constant 0 : index
    %13 = vector.load %arg7[%c0_12, %c0_13] : memref<640x128xf32, #tpu.memory_space<vmem>>, vector<640x128xf32>
    %cst_14 = arith.constant dense<0.000000e+00> : vector<64x128xf32>
    %14 = tpu.matmul %12, %13, %cst_14 {dimension_numbers = #tpu.dot_dimension_numbers<[1], [0], [0], [1], [0, 0, 1, 1], [], []>} : vector<64x640xf32>, vector<640x128xf32>, vector<64x128xf32> -> vector<64x128xf32>
    %c0_15 = arith.constant 0 : index
    %c0_16 = arith.constant 0 : index
    %15 = vector.load %arg8[%c0_15, %c0_16] : memref<64x128xf32, #tpu.memory_space<vmem>>, vector<64x128xf32>
    tpu.vector_store %arg8[%c0_15, %c0_16], %14 {strides = array<i32>} : memref<64x128xf32, #tpu.memory_space<vmem>>, vector<64x128xf32>,
    return
  }
  func.func @transform_0(%arg0: i32) -> (i32, i32) {
    %c0_i32 = arith.constant 0 : i32
    %c0_i32_0 = arith.constant 0 : i32
    return %arg0, %c0_i32 : i32, i32
  }
  func.func @transform_1(%arg0: i32) -> (i32, i32) {
    %c0_i32 = arith.constant 0 : i32
    %c0_i32_0 = arith.constant 0 : i32
    return %arg0, %c0_i32 : i32, i32
  }
  func.func @transform_2(%arg0: i32) -> (i32, i32) {
    %c0_i32 = arith.constant 0 : i32
    %c0_i32_0 = arith.constant 0 : i32
    %c0_i32_1 = arith.constant 0 : i32
    return %c0_i32, %c0_i32_0 : i32, i32
  }
  func.func @transform_3(%arg0: i32) -> (i32, i32) {
    %c0_i32 = arith.constant 0 : i32
    %c0_i32_0 = arith.constant 0 : i32
    %c0_i32_1 = arith.constant 0 : i32
    return %c0_i32, %c0_i32_0 : i32, i32
  }
  func.func @transform_4(%arg0: i32) -> (i32, i32) {
    %c0_i32 = arith.constant 0 : i32
    %c0_i32_0 = arith.constant 0 : i32
    %c0_i32_1 = arith.constant 0 : i32
    return %c0_i32, %c0_i32_0 : i32, i32
  }
  func.func @transform_5(%arg0: i32) -> (i32, i32) {
    %c0_i32 = arith.constant 0 : i32
    %c0_i32_0 = arith.constant 0 : i32
    %c0_i32_1 = arith.constant 0 : i32
    return %c0_i32, %c0_i32_0 : i32, i32
  }
  func.func @transform_6(%arg0: i32) -> (i32, i32) {
    %c0_i32 = arith.constant 0 : i32
    %c0_i32_0 = arith.constant 0 : i32
    %c0_i32_1 = arith.constant 0 : i32
    return %c0_i32, %c0_i32_0 : i32, i32
  }
  func.func @transform_7(%arg0: i32) -> (i32, i32) {
    %c0_i32 = arith.constant 0 : i32
    %c0_i32_0 = arith.constant 0 : i32
    return %arg0, %c0_i32 : i32, i32
  }
}

module attributes {stable_mosaic.version = 11 : i64} {
  func.func @_mml_kernel(%arg0: i32, %arg1: memref<64x32xf32, #tpu.memory_space<vmem>>, %arg2: memref<64x64xf32, #tpu.memory_space<vmem>>, %arg3: memref<32x640xf32, #tpu.memory_space<vmem>>, %arg4: memref<64x640xf32, #tpu.memory_space<vmem>>, %arg5: memref<1x640xf32, #tpu.memory_space<vmem>>, %arg6: memref<1x640xf32, #tpu.memory_space<vmem>>, %arg7: memref<640x128xf32, #tpu.memory_space<vmem>>, %arg8: memref<64x128xf32, #tpu.memory_space<vmem>>) attributes {dimension_semantics = [#tpu.dimension_semantics<parallel>], iteration_bounds = array<i64: 1>, scalar_prefetch = 0 : i64, scratch_operands = 0 : i64, tpu.core_type = #tpu.core_type<tc>, window_params = [{transform_indices = @transform_0, window_bounds = array<i64: 64, 32>}, {transform_indices = @transform_1, window_bounds = array<i64: 64, 64>}, {pipeline_mode = #tpu.pipeline_mode<synchronous>, transform_indices = @transform_2, window_bounds = array<i64: 32, 640>}, {pipeline_mode = #tpu.pipeline_mode<synchronous>, transform_indices = @transform_3, window_bounds = array<i64: 64, 640>}, {pipeline_mode = #tpu.pipeline_mode<synchronous>, transform_indices = @transform_4, window_bounds = array<i64: 1, 640>}, {pipeline_mode = #tpu.pipeline_mode<synchronous>, transform_indices = @transform_5, window_bounds = array<i64: 1, 640>}, {pipeline_mode = #tpu.pipeline_mode<synchronous>, transform_indices = @transform_6, window_bounds = array<i64: 640, 128>}, {transform_indices = @transform_7, window_bounds = array<i64: 64, 128>}]} {
    %c0 = arith.constant 0 : index
    %c0_0 = arith.constant 0 : index
    %0 = vector.load %arg1[%c0, %c0_0] : memref<64x32xf32, #tpu.memory_space<vmem>>, vector<64x32xf32>
    %c0_1 = arith.constant 0 : index
    %c0_2 = arith.constant 0 : index
    %1 = vector.load %arg3[%c0_1, %c0_2] : memref<32x640xf32, #tpu.memory_space<vmem>>, vector<32x640xf32>
    %cst = arith.constant dense<0.000000e+00> : vector<64x640xf32>
    %2 = tpu.matmul %0, %1, %cst {dimension_numbers = #tpu.dot_dimension_numbers<[1], [0], [0], [1], [0, 0, 1, 1], [], []>} : vector<64x32xf32>, vector<32x640xf32>, vector<64x640xf32> -> vector<64x640xf32>
    %c0_3 = arith.constant 0 : index
    %c0_4 = arith.constant 0 : index
    %3 = vector.load %arg5[%c0_3, %c0_4] : memref<1x640xf32, #tpu.memory_space<vmem>>, vector<1x640xf32>
    %4 = vector.broadcast %3 : vector<1x640xf32> to vector<64x640xf32>
    %5 = arith.addf %2, %4 : vector<64x640xf32>
    %c0_5 = arith.constant 0 : index
    %c0_6 = arith.constant 0 : index
    %6 = vector.load %arg2[%c0_5, %c0_6] : memref<64x64xf32, #tpu.memory_space<vmem>>, vector<64x64xf32>
    %c0_7 = arith.constant 0 : index
    %c0_8 = arith.constant 0 : index
    %7 = vector.load %arg4[%c0_7, %c0_8] : memref<64x640xf32, #tpu.memory_space<vmem>>, vector<64x640xf32>
    %cst_9 = arith.constant dense<0.000000e+00> : vector<64x640xf32>
    %8 = tpu.matmul %6, %7, %cst_9 {dimension_numbers = #tpu.dot_dimension_numbers<[1], [0], [0], [1], [0, 0, 1, 1], [], []>} : vector<64x64xf32>, vector<64x640xf32>, vector<64x640xf32> -> vector<64x640xf32>
    %c0_10 = arith.constant 0 : index
    %c0_11 = arith.constant 0 : index
    %9 = vector.load %arg6[%c0_10, %c0_11] : memref<1x640xf32, #tpu.memory_space<vmem>>, vector<1x640xf32>
    %10 = vector.broadcast %9 : vector<1x640xf32> to vector<64x640xf32>
    %11 = arith.addf %8, %10 : vector<64x640xf32>
    %12 = arith.mulf %5, %11 : vector<64x640xf32>
    %c0_12 = arith.constant 0 : index
    %c0_13 = arith.constant 0 : index
    %13 = vector.load %arg7[%c0_12, %c0_13] : memref<640x128xf32, #tpu.memory_space<vmem>>, vector<640x128xf32>
    %cst_14 = arith.constant dense<0.000000e+00> : vector<64x128xf32>
    %14 = tpu.matmul %12, %13, %cst_14 {dimension_numbers = #tpu.dot_dimension_numbers<[1], [0], [0], [1], [0, 0, 1, 1], [], []>} : vector<64x640xf32>, vector<640x128xf32>, vector<64x128xf32> -> vector<64x128xf32>
    %c0_15 = arith.constant 0 : index
    %c0_16 = arith.constant 0 : index
    %15 = vector.load %arg8[%c0_15, %c0_16] : memref<64x128xf32, #tpu.memory_space<vmem>>, vector<64x128xf32>
    tpu.vector_store %arg8[%c0_15, %c0_16], %14 {strides = array<i32>} : memref<64x128xf32, #tpu.memory_space<vmem>>, vector<64x128xf32>,
    return
  }
  func.func @transform_0(%arg0: i32) -> (i32, i32) {
    %c0_i32 = arith.constant 0 : i32
    %c0_i32_0 = arith.constant 0 : i32
    return %arg0, %c0_i32 : i32, i32
  }
  func.func @transform_1(%arg0: i32) -> (i32, i32) {
    %c0_i32 = arith.constant 0 : i32
    %c0_i32_0 = arith.constant 0 : i32
    return %arg0, %c0_i32 : i32, i32
  }
  func.func @transform_2(%arg0: i32) -> (i32, i32) {
    %c0_i32 = arith.constant 0 : i32
    %c0_i32_0 = arith.constant 0 : i32
    %c0_i32_1 = arith.constant 0 : i32
    return %c0_i32, %c0_i32_0 : i32, i32
  }
  func.func @transform_3(%arg0: i32) -> (i32, i32) {
    %c0_i32 = arith.constant 0 : i32
    %c0_i32_0 = arith.constant 0 : i32
    %c0_i32_1 = arith.constant 0 : i32
    return %c0_i32, %c0_i32_0 : i32, i32
  }
  func.func @transform_4(%arg0: i32) -> (i32, i32) {
    %c0_i32 = arith.constant 0 : i32
    %c0_i32_0 = arith.constant 0 : i32
    %c0_i32_1 = arith.constant 0 : i32
    return %c0_i32, %c0_i32_0 : i32, i32
  }
  func.func @transform_5(%arg0: i32) -> (i32, i32) {
    %c0_i32 = arith.constant 0 : i32
    %c0_i32_0 = arith.constant 0 : i32
    %c0_i32_1 = arith.constant 0 : i32
    return %c0_i32, %c0_i32_0 : i32, i32
  }
  func.func @transform_6(%arg0: i32) -> (i32, i32) {
    %c0_i32 = arith.constant 0 : i32
    %c0_i32_0 = arith.constant 0 : i32
    %c0_i32_1 = arith.constant 0 : i32
    return %c0_i32, %c0_i32_0 : i32, i32
  }
  func.func @transform_7(%arg0: i32) -> (i32, i32) {
    %c0_i32 = arith.constant 0 : i32
    %c0_i32_0 = arith.constant 0 : i32
    return %arg0, %c0_i32 : i32, i32
  }
}

</mosaic_0001>

<llo_original>
// kernel: tpu_custom_call.1
$region0: #{tpu_custom_call.1}
  #allocation0 [shape = 'u32[]', space=smem, size = 0x4, offset = 0x4, fixed_abs, tag = 'smem constant byte address 0x4 - core index']
  #allocation1 [shape = 'u32[72,128]{1,0:T(1,128)}', space=vmem, size = 0x9000, scoped, tag = 'internal scratch']
  %s0 = inlined_call_operand.vmem [shape: f32[64,32], index: 0, kind: input, shape index: {}]
  %s1 = inlined_call_operand.vmem [shape: f32[64,64], index: 1, kind: input, shape index: {}]
  %s2 = inlined_call_operand.hbm [shape: f32[32,640], index: 2, kind: input, shape index: {}]
  %s3 = inlined_call_operand.hbm [shape: f32[64,640], index: 3, kind: input, shape index: {}]
  %s4 = inlined_call_operand.vmem [shape: f32[1,640], index: 4, kind: input, shape index: {}]
  %s5 = inlined_call_operand.vmem [shape: f32[1,640], index: 5, kind: input, shape index: {}]
  %s6 = inlined_call_operand.hbm [shape: f32[640,128], index: 6, kind: input, shape index: {}]
  %s7 = inlined_call_operand.hbm [shape: f32[64,128], index: 7, kind: output, shape index: {}]
  %s8 = sld [smem:[#allocation0]]
  $region50: #{tpu_custom_call.1} parent=0
    _
  %s10 = ssub.s32 1, %s8
  %s11 = scalar_select 0, %s10, %s8
  $region1: #{tpu_custom_call.1} parent=0
    #allocation2 [shape = 'u8[81920]{0}', space=vmem, size = 0x14000, scoped, tag = 'input window, operand 2, single buffered']
    #allocation3 [shape = 's32[1]{0}', space=sflag, size = 0x4, scoped, tag = 'scoped memory for tpu_custom_call.1']
    #allocation4 [shape = 's32[1]{0}', space=sflag, size = 0x4, scoped, tag = 'scoped memory for tpu_custom_call.1']
    #allocation5 [shape = 'u8[163840]{0}', space=vmem, size = 0x28000, scoped, tag = 'input window, operand 3, single buffered']
    #allocation6 [shape = 's32[1]{0}', space=sflag, size = 0x4, scoped, tag = 'scoped memory for tpu_custom_call.1']
    #allocation7 [shape = 'u8[327680]{0}', space=vmem, size = 0x50000, scoped, tag = 'input window, operand 6, single buffered']
    #allocation8 [shape = 'u8[32768]{0}', space=vmem, size = 0x8000, scoped, tag = 'output window, operand 0, single buffered']
    %12 = vsyncpa [#allocation3], 0
    %13 = vsyncpa [#allocation6], 0
    %14 = vsyncpa [#allocation4], 0
    // Predicated region
    $region2: #{tpu_custom_call.1} parent=1 // pred_check
      _
    $region3: #{tpu_custom_call.1} parent=1 // pred_check_branch
      %16 = sbr.rel (0) target = $region5
    $region4: #{tpu_custom_call.1} parent=1 // pred_region
      _
    $region5: #{tpu_custom_call.1} parent=1 // pred_fallthru
      _
    // Predicated region
    $region6: #{tpu_custom_call.1} parent=1 // pred_check
      _
    $region7: #{tpu_custom_call.1} parent=1 // pred_check_branch
      %18 = sbr.rel (0) target = $region9
    $region8: #{tpu_custom_call.1} parent=1 // pred_region
      _
    $region9: #{tpu_custom_call.1} parent=1 // pred_fallthru
      _
    // Predicated region
    $region10: #{tpu_custom_call.1} parent=1 // pred_check
      _
    $region11: #{tpu_custom_call.1} parent=1 // pred_check_branch
      %20 = sbr.rel (0) target = $region13
    $region12: #{tpu_custom_call.1} parent=1 // pred_region
      %22 = vsyncadd [#allocation3], 0
      %s23 = sshll.u32 %s2, 4
      %s24 = int_to_ptr.hbm [resolvable:$true] %s23
      %s25 = sshll.u32 [#allocation2], 4
      %s26 = int_to_ptr.vmem [resolvable:$true] %s25
      %31 = dma.hbm_to_vmem [thread:$0]  %s24, 2560, %s26, [#allocation3], 640, 640, 40
    $region13: #{tpu_custom_call.1} parent=1 // pred_fallthru
      _
    // Predicated region
    $region14: #{tpu_custom_call.1} parent=1 // pred_check
      _
    $region15: #{tpu_custom_call.1} parent=1 // pred_check_branch
      %33 = sbr.rel (0) target = $region17
    $region16: #{tpu_custom_call.1} parent=1 // pred_region
      %35 = vsyncadd [#allocation6], 0
      %s36 = sshll.u32 %s3, 4
      %s37 = int_to_ptr.hbm [resolvable:$true] %s36
      %s38 = sshll.u32 [#allocation5], 4
      %s39 = int_to_ptr.vmem [resolvable:$true] %s38
      %44 = dma.hbm_to_vmem [thread:$0]  %s37, 5120, %s39, [#allocation6], 640, 640, 40
    $region17: #{tpu_custom_call.1} parent=1 // pred_fallthru
      _
    // Predicated region
    $region18: #{tpu_custom_call.1} parent=1 // pred_check
      _
    $region19: #{tpu_custom_call.1} parent=1 // pred_check_branch
      %46 = sbr.rel (0) target = $region21
    $region20: #{tpu_custom_call.1} parent=1 // pred_region
      _
    $region21: #{tpu_custom_call.1} parent=1 // pred_fallthru
      _
    // Predicated region
    $region22: #{tpu_custom_call.1} parent=1 // pred_check
      _
    $region23: #{tpu_custom_call.1} parent=1 // pred_check_branch
      %48 = sbr.rel (0) target = $region25
    $region24: #{tpu_custom_call.1} parent=1 // pred_region
      _
    $region25: #{tpu_custom_call.1} parent=1 // pred_fallthru
      _
    // Predicated region
    $region26: #{tpu_custom_call.1} parent=1 // pred_check
      _
    $region27: #{tpu_custom_call.1} parent=1 // pred_check_branch
      %50 = sbr.rel (0) target = $region29
    $region28: #{tpu_custom_call.1} parent=1 // pred_region
      %52 = vsyncadd [#allocation6], 0
      %s53 = sshll.u32 %s6, 4
      %s54 = int_to_ptr.hbm [resolvable:$true] %s53
      %s55 = sshll.u32 [#allocation7], 4
      %s56 = int_to_ptr.vmem [resolvable:$true] %s55
      %61 = dma.hbm_to_vmem [thread:$0]  %s54, 10240, %s56, [#allocation6], 128, 128, 8
    $region29: #{tpu_custom_call.1} parent=1 // pred_fallthru
      _
    // Predicated region
    $region30: #{tpu_custom_call.1} parent=1 // pred_check
      _
    $region31: #{tpu_custom_call.1} parent=1 // pred_check_branch
      %63 = sbr.rel (0) target = $region33
    $region32: #{tpu_custom_call.1} parent=1 // pred_region
      %65 = dma.done [#allocation3], 2560
    $region33: #{tpu_custom_call.1} parent=1 // pred_fallthru
      _
    // Predicated region
    $region34: #{tpu_custom_call.1} parent=1 // pred_check
      _
    $region35: #{tpu_custom_call.1} parent=1 // pred_check_branch
      %67 = sbr.rel (0) target = $region37
    $region36: #{tpu_custom_call.1} parent=1 // pred_region
      %69 = dma.done [#allocation6], 5120
    $region37: #{tpu_custom_call.1} parent=1 // pred_fallthru
      _
    // Predicated region
    $region38: #{tpu_custom_call.1} parent=1 // pred_check
      _
    $region39: #{tpu_custom_call.1} parent=1 // pred_check_branch
      %71 = sbr.rel (0) target = $region41
    $region40: #{tpu_custom_call.1} parent=1 // pred_region
      %73 = dma.done [#allocation6], 10240
    $region41: #{tpu_custom_call.1} parent=1 // pred_fallthru
      _
    %v74 = vld [vmem:[%s0] sm:$0xff]
    %v75 = vld [vmem:[%s0 + $0x8] sm:$0xff]
    %v76 = vld [vmem:[%s0 + $0x10] sm:$0xff]
    %v77 = vld [vmem:[%s0 + $0x18] sm:$0xff]
    %v78 = vld [vmem:[%s0 + $0x20] sm:$0xff]
    %v79 = vld [vmem:[%s0 + $0x28] sm:$0xff]
    %v80 = vld [vmem:[%s0 + $0x30] sm:$0xff]
    %v81 = vld [vmem:[%s0 + $0x38] sm:$0xff]
    %v82 = vld [vmem:[#allocation2] sm:$0xff]
    %v83 = vld [vmem:[#allocation2 + $0x8] sm:$0xff]
    %v84 = vld [vmem:[#allocation2 + $0x10] sm:$0xff]
    %v85 = vld [vmem:[#allocation2 + $0x18] sm:$0xff]
    %v86 = vld [vmem:[#allocation2 + $0x20] sm:$0xff]
    %v87 = vld [vmem:[#allocation2 + $0x28] sm:$0xff]
    %v88 = vld [vmem:[#allocation2 + $0x30] sm:$0xff]
    %v89 = vld [vmem:[#allocation2 + $0x38] sm:$0xff]
    %v90 = vld [vmem:[#allocation2 + $0x40] sm:$0xff]
    %v91 = vld [vmem:[#allocation2 + $0x48] sm:$0xff]
    %v92 = vld [vmem:[#allocation2 + $0x50] sm:$0xff]
    %v93 = vld [vmem:[#allocation2 + $0x58] sm:$0xff]
    %v94 = vld [vmem:[#allocation2 + $0x60] sm:$0xff]
    %v95 = vld [vmem:[#allocation2 + $0x68] sm:$0xff]
    %v96 = vld [vmem:[#allocation2 + $0x70] sm:$0xff]
    %v97 = vld [vmem:[#allocation2 + $0x78] sm:$0xff]
    %v98 = vld [vmem:[#allocation2 + $0x80] sm:$0xff]
    %v99 = vld [vmem:[#allocation2 + $0x88] sm:$0xff]
    %v100 = vld [vmem:[#allocation2 + $0x90] sm:$0xff]
    %v101 = vld [vmem:[#allocation2 + $0x98] sm:$0xff]
    %v102 = vld [vmem:[%s4] sm:$0x1f]
    %v104 = vperm.slane %v102, 0
    %v105 = vperm.slane %v102, 1
    %v106 = vperm.slane %v102, 2
    %v107 = vperm.slane %v102, 3
    %v108 = vperm.slane %v102, 4
    %vm114 = vcmask 261120
    %v116 = vsel %vm114, %v74, 0
    %v119 = vsel %vm114, %v75, 0
    %v122 = vsel %vm114, %v76, 0
    %v125 = vsel %vm114, %v77, 0
    %v128 = vsel %vm114, %v78, 0
    %v131 = vsel %vm114, %v79, 0
    %v134 = vsel %vm114, %v80, 0
    %v137 = vsel %vm114, %v81, 0
    %139 = vmatpush.msra.mxu0 0.0
    %140 = vmatpush.msra.mxu0 0.0
    %141 = vmatpush.msra.mxu0 0.0
    %142 = vmatpush.msra.mxu0 0.0
    %143 = vmatpush.msra.mxu0 0.0
    %144 = vmatpush.msra.mxu0 0.0
    %145 = vmatpush.msra.mxu0 0.0
    %146 = vmatpush.msra.mxu0 0.0
    %147 = vmatpush.msra.mxu0 0.0
    %148 = vmatpush.msra.mxu0 0.0
    %149 = vmatpush.msra.mxu0 0.0
    %150 = vmatpush.msra.mxu0 0.0
    %151 = vmatpush.msra.mxu0 %v97
    %152 = vmatpush.msra.mxu0 %v92
    %153 = vmatpush.msra.mxu0 %v87
    %154 = vmatpush.msra.mxu0 %v82
    %155 = vmatmul.f32.gmra.mxu0 %v116
    %v156 = vpop.f32.mrf.mxu0
    %v157 = vadd.f32 %v104, %v156
    %158 = vmatmul.f32.gmra.mxu0 %v119
    %v159 = vpop.f32.mrf.mxu0
    %v160 = vadd.f32 %v104, %v159
    %161 = vmatmul.f32.gmra.mxu0 %v122
    %v162 = vpop.f32.mrf.mxu0
    %v163 = vadd.f32 %v104, %v162
    %164 = vmatmul.f32.gmra.mxu0 %v125
    %v165 = vpop.f32.mrf.mxu0
    %v166 = vadd.f32 %v104, %v165
    %167 = vmatmul.f32.gmra.mxu0 %v128
    %v168 = vpop.f32.mrf.mxu0
    %v169 = vadd.f32 %v104, %v168
    %170 = vmatmul.f32.gmra.mxu0 %v131
    %v171 = vpop.f32.mrf.mxu0
    %v172 = vadd.f32 %v104, %v171
    %173 = vmatmul.f32.gmra.mxu0 %v134
    %v174 = vpop.f32.mrf.mxu0
    %v175 = vadd.f32 %v104, %v174
    %176 = vmatmul.f32.gmra.mxu0 %v137
    %v177 = vpop.f32.mrf.mxu0
    %v178 = vadd.f32 %v104, %v177
    %179 = vdwg.mxu0
    %180 = vmatpush.msra.mxu0 0.0
    %181 = vmatpush.msra.mxu0 0.0
    %182 = vmatpush.msra.mxu0 0.0
    %183 = vmatpush.msra.mxu0 0.0
    %184 = vmatpush.msra.mxu0 0.0
    %185 = vmatpush.msra.mxu0 0.0
    %186 = vmatpush.msra.mxu0 0.0
    %187 = vmatpush.msra.mxu0 0.0
    %188 = vmatpush.msra.mxu0 0.0
    %189 = vmatpush.msra.mxu0 0.0
    %190 = vmatpush.msra.mxu0 0.0
    %191 = vmatpush.msra.mxu0 0.0
    %192 = vmatpush.msra.mxu0 %v98
    %193 = vmatpush.msra.mxu0 %v93
    %194 = vmatpush.msra.mxu0 %v88
    %195 = vmatpush.msra.mxu0 %v83
    %196 = vmatmul.f32.gmra.mxu0 %v116
    %v197 = vpop.f32.mrf.mxu0
    %v198 = vadd.f32 %v105, %v197
    %199 = vmatmul.f32.gmra.mxu0 %v119
    %v200 = vpop.f32.mrf.mxu0
    %v201 = vadd.f32 %v105, %v200
    %202 = vmatmul.f32.gmra.mxu0 %v122
    %v203 = vpop.f32.mrf.mxu0
    %v204 = vadd.f32 %v105, %v203
    %205 = vmatmul.f32.gmra.mxu0 %v125
    %v206 = vpop.f32.mrf.mxu0
    %v207 = vadd.f32 %v105, %v206
    %208 = vmatmul.f32.gmra.mxu0 %v128
    %v209 = vpop.f32.mrf.mxu0
    %v210 = vadd.f32 %v105, %v209
    %211 = vmatmul.f32.gmra.mxu0 %v131
    %v212 = vpop.f32.mrf.mxu0
    %v213 = vadd.f32 %v105, %v212
    %214 = vmatmul.f32.gmra.mxu0 %v134
    %v215 = vpop.f32.mrf.mxu0
    %v216 = vadd.f32 %v105, %v215
    %217 = vmatmul.f32.gmra.mxu0 %v137
    %v218 = vpop.f32.mrf.mxu0
    %v219 = vadd.f32 %v105, %v218
    %220 = vdwg.mxu0
    %221 = vmatpush.msra.mxu0 0.0
    %222 = vmatpush.msra.mxu0 0.0
    %223 = vmatpush.msra.mxu0 0.0
    %224 = vmatpush.msra.mxu0 0.0
    %225 = vmatpush.msra.mxu0 0.0
    %226 = vmatpush.msra.mxu0 0.0
    %227 = vmatpush.msra.mxu0 0.0
    %228 = vmatpush.msra.mxu0 0.0
    %229 = vmatpush.msra.mxu0 0.0
    %230 = vmatpush.msra.mxu0 0.0
    %231 = vmatpush.msra.mxu0 0.0
    %232 = vmatpush.msra.mxu0 0.0
    %233 = vmatpush.msra.mxu0 %v99
    %234 = vmatpush.msra.mxu0 %v94
    %235 = vmatpush.msra.mxu0 %v89
    %236 = vmatpush.msra.mxu0 %v84
    %237 = vmatmul.f32.gmra.mxu0 %v116
    %v238 = vpop.f32.mrf.mxu0
    %v239 = vadd.f32 %v106, %v238
    %240 = vmatmul.f32.gmra.mxu0 %v119
    %v241 = vpop.f32.mrf.mxu0
    %v242 = vadd.f32 %v106, %v241
    %243 = vmatmul.f32.gmra.mxu0 %v122
    %v244 = vpop.f32.mrf.mxu0
    %v245 = vadd.f32 %v106, %v244
    %246 = vmatmul.f32.gmra.mxu0 %v125
    %v247 = vpop.f32.mrf.mxu0
    %v248 = vadd.f32 %v106, %v247
    %249 = vmatmul.f32.gmra.mxu0 %v128
    %v250 = vpop.f32.mrf.mxu0
    %v251 = vadd.f32 %v106, %v250
    %252 = vmatmul.f32.gmra.mxu0 %v131
    %v253 = vpop.f32.mrf.mxu0
    %v254 = vadd.f32 %v106, %v253
    %255 = vmatmul.f32.gmra.mxu0 %v134
    %v256 = vpop.f32.mrf.mxu0
    %v257 = vadd.f32 %v106, %v256
    %258 = vmatmul.f32.gmra.mxu0 %v137
    %v259 = vpop.f32.mrf.mxu0
    %v260 = vadd.f32 %v106, %v259
    %261 = vdwg.mxu0
    %262 = vmatpush.msra.mxu0 0.0
    %263 = vmatpush.msra.mxu0 0.0
    %264 = vmatpush.msra.mxu0 0.0
    %265 = vmatpush.msra.mxu0 0.0
    %266 = vmatpush.msra.mxu0 0.0
    %267 = vmatpush.msra.mxu0 0.0
    %268 = vmatpush.msra.mxu0 0.0
    %269 = vmatpush.msra.mxu0 0.0
    %270 = vmatpush.msra.mxu0 0.0
    %271 = vmatpush.msra.mxu0 0.0
    %272 = vmatpush.msra.mxu0 0.0
    %273 = vmatpush.msra.mxu0 0.0
    %274 = vmatpush.msra.mxu0 %v100
    %275 = vmatpush.msra.mxu0 %v95
    %276 = vmatpush.msra.mxu0 %v90
    %277 = vmatpush.msra.mxu0 %v85
    %278 = vmatmul.f32.gmra.mxu0 %v116
    %v279 = vpop.f32.mrf.mxu0
    %v280 = vadd.f32 %v107, %v279
    %281 = vmatmul.f32.gmra.mxu0 %v119
    %v282 = vpop.f32.mrf.mxu0
    %v283 = vadd.f32 %v107, %v282
    %284 = vmatmul.f32.gmra.mxu0 %v122
    %v285 = vpop.f32.mrf.mxu0
    %v286 = vadd.f32 %v107, %v285
    %287 = vmatmul.f32.gmra.mxu0 %v125
    %v288 = vpop.f32.mrf.mxu0
    %v289 = vadd.f32 %v107, %v288
    %290 = vmatmul.f32.gmra.mxu0 %v128
    %v291 = vpop.f32.mrf.mxu0
    %v292 = vadd.f32 %v107, %v291
    %293 = vmatmul.f32.gmra.mxu0 %v131
    %v294 = vpop.f32.mrf.mxu0
    %v295 = vadd.f32 %v107, %v294
    %296 = vmatmul.f32.gmra.mxu0 %v134
    %v297 = vpop.f32.mrf.mxu0
    %v298 = vadd.f32 %v107, %v297
    %299 = vmatmul.f32.gmra.mxu0 %v137
    %v300 = vpop.f32.mrf.mxu0
    %v301 = vadd.f32 %v107, %v300
    %302 = vdwg.mxu0
    %303 = vmatpush.msra.mxu0 0.0
    %304 = vmatpush.msra.mxu0 0.0
    %305 = vmatpush.msra.mxu0 0.0
    %306 = vmatpush.msra.mxu0 0.0
    %307 = vmatpush.msra.mxu0 0.0
    %308 = vmatpush.msra.mxu0 0.0
    %309 = vmatpush.msra.mxu0 0.0
    %310 = vmatpush.msra.mxu0 0.0
    %311 = vmatpush.msra.mxu0 0.0
    %312 = vmatpush.msra.mxu0 0.0
    %313 = vmatpush.msra.mxu0 0.0
    %314 = vmatpush.msra.mxu0 0.0
    %315 = vmatpush.msra.mxu0 %v101
    %316 = vmatpush.msra.mxu0 %v96
    %317 = vmatpush.msra.mxu0 %v91
    %318 = vmatpush.msra.mxu0 %v86
    %319 = vmatmul.f32.gmra.mxu0 %v116
    %v320 = vpop.f32.mrf.mxu0
    %v321 = vadd.f32 %v108, %v320
    %322 = vmatmul.f32.gmra.mxu0 %v119
    %v323 = vpop.f32.mrf.mxu0
    %v324 = vadd.f32 %v108, %v323
    %325 = vmatmul.f32.gmra.mxu0 %v122
    %v326 = vpop.f32.mrf.mxu0
    %v327 = vadd.f32 %v108, %v326
    %328 = vmatmul.f32.gmra.mxu0 %v125
    %v329 = vpop.f32.mrf.mxu0
    %v330 = vadd.f32 %v108, %v329
    %331 = vmatmul.f32.gmra.mxu0 %v128
    %v332 = vpop.f32.mrf.mxu0
    %v333 = vadd.f32 %v108, %v332
    %334 = vmatmul.f32.gmra.mxu0 %v131
    %v335 = vpop.f32.mrf.mxu0
    %v336 = vadd.f32 %v108, %v335
    %337 = vmatmul.f32.gmra.mxu0 %v134
    %v338 = vpop.f32.mrf.mxu0
    %v339 = vadd.f32 %v108, %v338
    %340 = vmatmul.f32.gmra.mxu0 %v137
    %v341 = vpop.f32.mrf.mxu0
    %v342 = vadd.f32 %v108, %v341
    %343 = vdwg.mxu0
    %v344 = vld [vmem:[%s1] sm:$0xff]
    %v345 = vld [vmem:[%s1 + $0x8] sm:$0xff]
    %v346 = vld [vmem:[%s1 + $0x10] sm:$0xff]
    %v347 = vld [vmem:[%s1 + $0x18] sm:$0xff]
    %v348 = vld [vmem:[%s1 + $0x20] sm:$0xff]
    %v349 = vld [vmem:[%s1 + $0x28] sm:$0xff]
    %v350 = vld [vmem:[%s1 + $0x30] sm:$0xff]
    %v351 = vld [vmem:[%s1 + $0x38] sm:$0xff]
    %v352 = vld [vmem:[#allocation5] sm:$0xff]
    %v353 = vld [vmem:[#allocation5 + $0x8] sm:$0xff]
    %v354 = vld [vmem:[#allocation5 + $0x10] sm:$0xff]
    %v355 = vld [vmem:[#allocation5 + $0x18] sm:$0xff]
    %v356 = vld [vmem:[#allocation5 + $0x20] sm:$0xff]
    %v357 = vld [vmem:[#allocation5 + $0x28] sm:$0xff]
    %v358 = vld [vmem:[#allocation5 + $0x30] sm:$0xff]
    %v359 = vld [vmem:[#allocation5 + $0x38] sm:$0xff]
    %v360 = vld [vmem:[#allocation5 + $0x40] sm:$0xff]
    %v361 = vld [vmem:[#allocation5 + $0x48] sm:$0xff]
    %v362 = vld [vmem:[#allocation5 + $0x50] sm:$0xff]
    %v363 = vld [vmem:[#allocation5 + $0x58] sm:$0xff]
    %v364 = vld [vmem:[#allocation5 + $0x60] sm:$0xff]
    %v365 = vld [vmem:[#allocation5 + $0x68] sm:$0xff]
    %v366 = vld [vmem:[#allocation5 + $0x70] sm:$0xff]
    %v367 = vld [vmem:[#allocation5 + $0x78] sm:$0xff]
    %v368 = vld [vmem:[#allocation5 + $0x80] sm:$0xff]
    %v369 = vld [vmem:[#allocation5 + $0x88] sm:$0xff]
    %v370 = vld [vmem:[#allocation5 + $0x90] sm:$0xff]
    %v371 = vld [vmem:[#allocation5 + $0x98] sm:$0xff]
    %v372 = vld [vmem:[#allocation5 + $0xa0] sm:$0xff]
    %v373 = vld [vmem:[#allocation5 + $0xa8] sm:$0xff]
    %v374 = vld [vmem:[#allocation5 + $0xb0] sm:$0xff]
    %v375 = vld [vmem:[#allocation5 + $0xb8] sm:$0xff]
    %v376 = vld [vmem:[#allocation5 + $0xc0] sm:$0xff]
    %v377 = vld [vmem:[#allocation5 + $0xc8] sm:$0xff]
    %v378 = vld [vmem:[#allocation5 + $0xd0] sm:$0xff]
    %v379 = vld [vmem:[#allocation5 + $0xd8] sm:$0xff]
    %v380 = vld [vmem:[#allocation5 + $0xe0] sm:$0xff]
    %v381 = vld [vmem:[#allocation5 + $0xe8] sm:$0xff]
    %v382 = vld [vmem:[#allocation5 + $0xf0] sm:$0xff]
    %v383 = vld [vmem:[#allocation5 + $0xf8] sm:$0xff]
    %v384 = vld [vmem:[#allocation5 + $0x100] sm:$0xff]
    %v385 = vld [vmem:[#allocation5 + $0x108] sm:$0xff]
    %v386 = vld [vmem:[#allocation5 + $0x110] sm:$0xff]
    %v387 = vld [vmem:[#allocation5 + $0x118] sm:$0xff]
    %v388 = vld [vmem:[#allocation5 + $0x120] sm:$0xff]
    %v389 = vld [vmem:[#allocation5 + $0x128] sm:$0xff]
    %v390 = vld [vmem:[#allocation5 + $0x130] sm:$0xff]
    %v391 = vld [vmem:[#allocation5 + $0x138] sm:$0xff]
    %v392 = vld [vmem:[%s5] sm:$0x1f]
    %v394 = vperm.slane %v392, 0
    %v395 = vperm.slane %v392, 1
    %v396 = vperm.slane %v392, 2
    %v397 = vperm.slane %v392, 3
    %v398 = vperm.slane %v392, 4
    %vm404 = vcmask 523264
    %v406 = vsel %vm404, %v344, 0
    %v409 = vsel %vm404, %v345, 0
    %v412 = vsel %vm404, %v346, 0
    %v415 = vsel %vm404, %v347, 0
    %v418 = vsel %vm404, %v348, 0
    %v421 = vsel %vm404, %v349, 0
    %v424 = vsel %vm404, %v350, 0
    %v427 = vsel %vm404, %v351, 0
    %429 = vmatpush.msra.mxu0 0.0
    %430 = vmatpush.msra.mxu0 0.0
    %431 = vmatpush.msra.mxu0 0.0
    %432 = vmatpush.msra.mxu0 0.0
    %433 = vmatpush.msra.mxu0 0.0
    %434 = vmatpush.msra.mxu0 0.0
    %435 = vmatpush.msra.mxu0 0.0
    %436 = vmatpush.msra.mxu0 0.0
    %437 = vmatpush.msra.mxu0 %v387
    %438 = vmatpush.msra.mxu0 %v382
    %439 = vmatpush.msra.mxu0 %v377
    %440 = vmatpush.msra.mxu0 %v372
    %441 = vmatpush.msra.mxu0 %v367
    %442 = vmatpush.msra.mxu0 %v362
    %443 = vmatpush.msra.mxu0 %v357
    %444 = vmatpush.msra.mxu0 %v352
    %445 = vmatmul.f32.gmra.mxu0 %v406
    %v446 = vpop.f32.mrf.mxu0
    %v447 = vadd.f32 %v394, %v446
    %448 = vmatmul.f32.gmra.mxu0 %v409
    %v449 = vpop.f32.mrf.mxu0
    %v450 = vadd.f32 %v394, %v449
    %451 = vmatmul.f32.gmra.mxu0 %v412
    %v452 = vpop.f32.mrf.mxu0
    %v453 = vadd.f32 %v394, %v452
    %454 = vmatmul.f32.gmra.mxu0 %v415
    %v455 = vpop.f32.mrf.mxu0
    %v456 = vadd.f32 %v394, %v455
    %457 = vmatmul.f32.gmra.mxu0 %v418
    %v458 = vpop.f32.mrf.mxu0
    %v459 = vadd.f32 %v394, %v458
    %460 = vmatmul.f32.gmra.mxu0 %v421
    %v461 = vpop.f32.mrf.mxu0
    %v462 = vadd.f32 %v394, %v461
    %463 = vmatmul.f32.gmra.mxu0 %v424
    %v464 = vpop.f32.mrf.mxu0
    %v465 = vadd.f32 %v394, %v464
    %466 = vmatmul.f32.gmra.mxu0 %v427
    %v467 = vpop.f32.mrf.mxu0
    %v468 = vadd.f32 %v394, %v467
    %469 = vdwg.mxu0
    %470 = vmatpush.msra.mxu0 0.0
    %471 = vmatpush.msra.mxu0 0.0
    %472 = vmatpush.msra.mxu0 0.0
    %473 = vmatpush.msra.mxu0 0.0
    %474 = vmatpush.msra.mxu0 0.0
    %475 = vmatpush.msra.mxu0 0.0
    %476 = vmatpush.msra.mxu0 0.0
    %477 = vmatpush.msra.mxu0 0.0
    %478 = vmatpush.msra.mxu0 %v388
    %479 = vmatpush.msra.mxu0 %v383
    %480 = vmatpush.msra.mxu0 %v378
    %481 = vmatpush.msra.mxu0 %v373
    %482 = vmatpush.msra.mxu0 %v368
    %483 = vmatpush.msra.mxu0 %v363
    %484 = vmatpush.msra.mxu0 %v358
    %485 = vmatpush.msra.mxu0 %v353
    %486 = vmatmul.f32.gmra.mxu0 %v406
    %v487 = vpop.f32.mrf.mxu0
    %v488 = vadd.f32 %v395, %v487
    %489 = vmatmul.f32.gmra.mxu0 %v409
    %v490 = vpop.f32.mrf.mxu0
    %v491 = vadd.f32 %v395, %v490
    %492 = vmatmul.f32.gmra.mxu0 %v412
    %v493 = vpop.f32.mrf.mxu0
    %v494 = vadd.f32 %v395, %v493
    %495 = vmatmul.f32.gmra.mxu0 %v415
    %v496 = vpop.f32.mrf.mxu0
    %v497 = vadd.f32 %v395, %v496
    %498 = vmatmul.f32.gmra.mxu0 %v418
    %v499 = vpop.f32.mrf.mxu0
    %v500 = vadd.f32 %v395, %v499
    %501 = vmatmul.f32.gmra.mxu0 %v421
    %v502 = vpop.f32.mrf.mxu0
    %v503 = vadd.f32 %v395, %v502
    %504 = vmatmul.f32.gmra.mxu0 %v424
    %v505 = vpop.f32.mrf.mxu0
    %v506 = vadd.f32 %v395, %v505
    %507 = vmatmul.f32.gmra.mxu0 %v427
    %v508 = vpop.f32.mrf.mxu0
    %v509 = vadd.f32 %v395, %v508
    %510 = vdwg.mxu0
    %511 = vmatpush.msra.mxu0 0.0
    %512 = vmatpush.msra.mxu0 0.0
    %513 = vmatpush.msra.mxu0 0.0
    %514 = vmatpush.msra.mxu0 0.0
    %515 = vmatpush.msra.mxu0 0.0
    %516 = vmatpush.msra.mxu0 0.0
    %517 = vmatpush.msra.mxu0 0.0
    %518 = vmatpush.msra.mxu0 0.0
    %519 = vmatpush.msra.mxu0 %v389
    %520 = vmatpush.msra.mxu0 %v384
    %521 = vmatpush.msra.mxu0 %v379
    %522 = vmatpush.msra.mxu0 %v374
    %523 = vmatpush.msra.mxu0 %v369
    %524 = vmatpush.msra.mxu0 %v364
    %525 = vmatpush.msra.mxu0 %v359
    %526 = vmatpush.msra.mxu0 %v354
    %527 = vmatmul.f32.gmra.mxu0 %v406
    %v528 = vpop.f32.mrf.mxu0
    %v529 = vadd.f32 %v396, %v528
    %530 = vmatmul.f32.gmra.mxu0 %v409
    %v531 = vpop.f32.mrf.mxu0
    %v532 = vadd.f32 %v396, %v531
    %533 = vmatmul.f32.gmra.mxu0 %v412
    %v534 = vpop.f32.mrf.mxu0
    %v535 = vadd.f32 %v396, %v534
    %536 = vmatmul.f32.gmra.mxu0 %v415
    %v537 = vpop.f32.mrf.mxu0
    %v538 = vadd.f32 %v396, %v537
    %539 = vmatmul.f32.gmra.mxu0 %v418
    %v540 = vpop.f32.mrf.mxu0
    %v541 = vadd.f32 %v396, %v540
    %542 = vmatmul.f32.gmra.mxu0 %v421
    %v543 = vpop.f32.mrf.mxu0
    %v544 = vadd.f32 %v396, %v543
    %545 = vmatmul.f32.gmra.mxu0 %v424
    %v546 = vpop.f32.mrf.mxu0
    %v547 = vadd.f32 %v396, %v546
    %548 = vmatmul.f32.gmra.mxu0 %v427
    %v549 = vpop.f32.mrf.mxu0
    %v550 = vadd.f32 %v396, %v549
    %551 = vdwg.mxu0
    %552 = vmatpush.msra.mxu0 0.0
    %553 = vmatpush.msra.mxu0 0.0
    %554 = vmatpush.msra.mxu0 0.0
    %555 = vmatpush.msra.mxu0 0.0
    %556 = vmatpush.msra.mxu0 0.0
    %557 = vmatpush.msra.mxu0 0.0
    %558 = vmatpush.msra.mxu0 0.0
    %559 = vmatpush.msra.mxu0 0.0
    %560 = vmatpush.msra.mxu0 %v390
    %561 = vmatpush.msra.mxu0 %v385
    %562 = vmatpush.msra.mxu0 %v380
    %563 = vmatpush.msra.mxu0 %v375
    %564 = vmatpush.msra.mxu0 %v370
    %565 = vmatpush.msra.mxu0 %v365
    %566 = vmatpush.msra.mxu0 %v360
    %567 = vmatpush.msra.mxu0 %v355
    %568 = vmatmul.f32.gmra.mxu0 %v406
    %v569 = vpop.f32.mrf.mxu0
    %v570 = vadd.f32 %v397, %v569
    %571 = vmatmul.f32.gmra.mxu0 %v409
    %v572 = vpop.f32.mrf.mxu0
    %v573 = vadd.f32 %v397, %v572
    %574 = vmatmul.f32.gmra.mxu0 %v412
    %v575 = vpop.f32.mrf.mxu0
    %v576 = vadd.f32 %v397, %v575
    %577 = vmatmul.f32.gmra.mxu0 %v415
    %v578 = vpop.f32.mrf.mxu0
    %v579 = vadd.f32 %v397, %v578
    %580 = vmatmul.f32.gmra.mxu0 %v418
    %v581 = vpop.f32.mrf.mxu0
    %v582 = vadd.f32 %v397, %v581
    %583 = vmatmul.f32.gmra.mxu0 %v421
    %v584 = vpop.f32.mrf.mxu0
    %v585 = vadd.f32 %v397, %v584
    %586 = vmatmul.f32.gmra.mxu0 %v424
    %v587 = vpop.f32.mrf.mxu0
    %v588 = vadd.f32 %v397, %v587
    %589 = vmatmul.f32.gmra.mxu0 %v427
    %v590 = vpop.f32.mrf.mxu0
    %v591 = vadd.f32 %v397, %v590
    %592 = vdwg.mxu0
    %593 = vmatpush.msra.mxu0 0.0
    %594 = vmatpush.msra.mxu0 0.0
    %595 = vmatpush.msra.mxu0 0.0
    %596 = vmatpush.msra.mxu0 0.0
    %597 = vmatpush.msra.mxu0 0.0
    %598 = vmatpush.msra.mxu0 0.0
    %599 = vmatpush.msra.mxu0 0.0
    %600 = vmatpush.msra.mxu0 0.0
    %601 = vmatpush.msra.mxu0 %v391
    %602 = vmatpush.msra.mxu0 %v386
    %603 = vmatpush.msra.mxu0 %v381
    %604 = vmatpush.msra.mxu0 %v376
    %605 = vmatpush.msra.mxu0 %v371
    %606 = vmatpush.msra.mxu0 %v366
    %607 = vmatpush.msra.mxu0 %v361
    %608 = vmatpush.msra.mxu0 %v356
    %609 = vmatmul.f32.gmra.mxu0 %v406
    %v610 = vpop.f32.mrf.mxu0
    %v611 = vadd.f32 %v398, %v610
    %612 = vmatmul.f32.gmra.mxu0 %v409
    %v613 = vpop.f32.mrf.mxu0
    %v614 = vadd.f32 %v398, %v613
    %615 = vmatmul.f32.gmra.mxu0 %v412
    %v616 = vpop.f32.mrf.mxu0
    %v617 = vadd.f32 %v398, %v616
    %618 = vmatmul.f32.gmra.mxu0 %v415
    %v619 = vpop.f32.mrf.mxu0
    %v620 = vadd.f32 %v398, %v619
    %621 = vmatmul.f32.gmra.mxu0 %v418
    %v622 = vpop.f32.mrf.mxu0
    %v623 = vadd.f32 %v398, %v622
    %624 = vmatmul.f32.gmra.mxu0 %v421
    %v625 = vpop.f32.mrf.mxu0
    %v626 = vadd.f32 %v398, %v625
    %627 = vmatmul.f32.gmra.mxu0 %v424
    %v628 = vpop.f32.mrf.mxu0
    %v629 = vadd.f32 %v398, %v628
    %630 = vmatmul.f32.gmra.mxu0 %v427
    %v631 = vpop.f32.mrf.mxu0
    %v632 = vadd.f32 %v398, %v631
    %633 = vdwg.mxu0
    %v634 = vmul.f32 %v157, %v447
    %v635 = vmul.f32 %v198, %v488
    %v636 = vmul.f32 %v239, %v529
    %v637 = vmul.f32 %v280, %v570
    %v638 = vmul.f32 %v321, %v611
    %v639 = vmul.f32 %v160, %v450
    %v640 = vmul.f32 %v201, %v491
    %v641 = vmul.f32 %v242, %v532
    %v642 = vmul.f32 %v283, %v573
    %v643 = vmul.f32 %v324, %v614
    %v644 = vmul.f32 %v163, %v453
    %v645 = vmul.f32 %v204, %v494
    %v646 = vmul.f32 %v245, %v535
    %v647 = vmul.f32 %v286, %v576
    %v648 = vmul.f32 %v327, %v617
    %v649 = vmul.f32 %v166, %v456
    %v650 = vmul.f32 %v207, %v497
    %v651 = vmul.f32 %v248, %v538
    %v652 = vmul.f32 %v289, %v579
    %v653 = vmul.f32 %v330, %v620
    %v654 = vmul.f32 %v169, %v459
    %v655 = vmul.f32 %v210, %v500
    %v656 = vmul.f32 %v251, %v541
    %v657 = vmul.f32 %v292, %v582
    %v658 = vmul.f32 %v333, %v623
    %v659 = vmul.f32 %v172, %v462
    %v660 = vmul.f32 %v213, %v503
    %v661 = vmul.f32 %v254, %v544
    %v662 = vmul.f32 %v295, %v585
    %v663 = vmul.f32 %v336, %v626
    %v664 = vmul.f32 %v175, %v465
    %v665 = vmul.f32 %v216, %v506
    %v666 = vmul.f32 %v257, %v547
    %v667 = vmul.f32 %v298, %v588
    %v668 = vmul.f32 %v339, %v629
    %v669 = vmul.f32 %v178, %v468
    %v670 = vmul.f32 %v219, %v509
    %v671 = vmul.f32 %v260, %v550
    %v672 = vmul.f32 %v301, %v591
    %v673 = vmul.f32 %v342, %v632
    %v674 = vld [vmem:[#allocation7] sm:$0xff]
    %v675 = vld [vmem:[#allocation7 + $0x8] sm:$0xff]
    %v676 = vld [vmem:[#allocation7 + $0x10] sm:$0xff]
    %v677 = vld [vmem:[#allocation7 + $0x18] sm:$0xff]
    %v678 = vld [vmem:[#allocation7 + $0x20] sm:$0xff]
    %v679 = vld [vmem:[#allocation7 + $0x28] sm:$0xff]
    %v680 = vld [vmem:[#allocation7 + $0x30] sm:$0xff]
    %v681 = vld [vmem:[#allocation7 + $0x38] sm:$0xff]
    %v682 = vld [vmem:[#allocation7 + $0x40] sm:$0xff]
    %v683 = vld [vmem:[#allocation7 + $0x48] sm:$0xff]
    %v684 = vld [vmem:[#allocation7 + $0x50] sm:$0xff]
    %v685 = vld [vmem:[#allocation7 + $0x58] sm:$0xff]
    %v686 = vld [vmem:[#allocation7 + $0x60] sm:$0xff]
    %v687 = vld [vmem:[#allocation7 + $0x68] sm:$0xff]
    %v688 = vld [vmem:[#allocation7 + $0x70] sm:$0xff]
    %v689 = vld [vmem:[#allocation7 + $0x78] sm:$0xff]
    %v690 = vld [vmem:[#allocation7 + $0x80] sm:$0xff]
    %v691 = vld [vmem:[#allocation7 + $0x88] sm:$0xff]
    %v692 = vld [vmem:[#allocation7 + $0x90] sm:$0xff]
    %v693 = vld [vmem:[#allocation7 + $0x98] sm:$0xff]
    %v694 = vld [vmem:[#allocation7 + $0xa0] sm:$0xff]
    %v695 = vld [vmem:[#allocation7 + $0xa8] sm:$0xff]
    %v696 = vld [vmem:[#allocation7 + $0xb0] sm:$0xff]
    %v697 = vld [vmem:[#allocation7 + $0xb8] sm:$0xff]
    %v698 = vld [vmem:[#allocation7 + $0xc0] sm:$0xff]
    %v699 = vld [vmem:[#allocation7 + $0xc8] sm:$0xff]
    %v700 = vld [vmem:[#allocation7 + $0xd0] sm:$0xff]
    %v701 = vld [vmem:[#allocation7 + $0xd8] sm:$0xff]
    %v702 = vld [vmem:[#allocation7 + $0xe0] sm:$0xff]
    %v703 = vld [vmem:[#allocation7 + $0xe8] sm:$0xff]
    %v704 = vld [vmem:[#allocation7 + $0xf0] sm:$0xff]
    %v705 = vld [vmem:[#allocation7 + $0xf8] sm:$0xff]
    %v706 = vld [vmem:[#allocation7 + $0x100] sm:$0xff]
    %v707 = vld [vmem:[#allocation7 + $0x108] sm:$0xff]
    %v708 = vld [vmem:[#allocation7 + $0x110] sm:$0xff]
    %v709 = vld [vmem:[#allocation7 + $0x118] sm:$0xff]
    %v710 = vld [vmem:[#allocation7 + $0x120] sm:$0xff]
    %v711 = vld [vmem:[#allocation7 + $0x128] sm:$0xff]
    %v712 = vld [vmem:[#allocation7 + $0x130] sm:$0xff]
    %v713 = vld [vmem:[#allocation7 + $0x138] sm:$0xff]
    %v714 = vld [vmem:[#allocation7 + $0x140] sm:$0xff]
    %v715 = vld [vmem:[#allocation7 + $0x148] sm:$0xff]
    %v716 = vld [vmem:[#allocation7 + $0x150] sm:$0xff]
    %v717 = vld [vmem:[#allocation7 + $0x158] sm:$0xff]
    %v718 = vld [vmem:[#allocation7 + $0x160] sm:$0xff]
    %v719 = vld [vmem:[#allocation7 + $0x168] sm:$0xff]
    %v720 = vld [vmem:[#allocation7 + $0x170] sm:$0xff]
    %v721 = vld [vmem:[#allocation7 + $0x178] sm:$0xff]
    %v722 = vld [vmem:[#allocation7 + $0x180] sm:$0xff]
    %v723 = vld [vmem:[#allocation7 + $0x188] sm:$0xff]
    %v724 = vld [vmem:[#allocation7 + $0x190] sm:$0xff]
    %v725 = vld [vmem:[#allocation7 + $0x198] sm:$0xff]
    %v726 = vld [vmem:[#allocation7 + $0x1a0] sm:$0xff]
    %v727 = vld [vmem:[#allocation7 + $0x1a8] sm:$0xff]
    %v728 = vld [vmem:[#allocation7 + $0x1b0] sm:$0xff]
    %v729 = vld [vmem:[#allocation7 + $0x1b8] sm:$0xff]
    %v730 = vld [vmem:[#allocation7 + $0x1c0] sm:$0xff]
    %v731 = vld [vmem:[#allocation7 + $0x1c8] sm:$0xff]
    %v732 = vld [vmem:[#allocation7 + $0x1d0] sm:$0xff]
    %v733 = vld [vmem:[#allocation7 + $0x1d8] sm:$0xff]
    %v734 = vld [vmem:[#allocation7 + $0x1e0] sm:$0xff]
    %v735 = vld [vmem:[#allocation7 + $0x1e8] sm:$0xff]
    %v736 = vld [vmem:[#allocation7 + $0x1f0] sm:$0xff]
    %v737 = vld [vmem:[#allocation7 + $0x1f8] sm:$0xff]
    %v738 = vld [vmem:[#allocation7 + $0x200] sm:$0xff]
    %v739 = vld [vmem:[#allocation7 + $0x208] sm:$0xff]
    %v740 = vld [vmem:[#allocation7 + $0x210] sm:$0xff]
    %v741 = vld [vmem:[#allocation7 + $0x218] sm:$0xff]
    %v742 = vld [vmem:[#allocation7 + $0x220] sm:$0xff]
    %v743 = vld [vmem:[#allocation7 + $0x228] sm:$0xff]
    %v744 = vld [vmem:[#allocation7 + $0x230] sm:$0xff]
    %v745 = vld [vmem:[#allocation7 + $0x238] sm:$0xff]
    %v746 = vld [vmem:[#allocation7 + $0x240] sm:$0xff]
    %v747 = vld [vmem:[#allocation7 + $0x248] sm:$0xff]
    %v748 = vld [vmem:[#allocation7 + $0x250] sm:$0xff]
    %v749 = vld [vmem:[#allocation7 + $0x258] sm:$0xff]
    %v750 = vld [vmem:[#allocation7 + $0x260] sm:$0xff]
    %v751 = vld [vmem:[#allocation7 + $0x268] sm:$0xff]
    %v752 = vld [vmem:[#allocation7 + $0x270] sm:$0xff]
    %v753 = vld [vmem:[#allocation7 + $0x278] sm:$0xff]
    %754 = vmatpush.msra.mxu0 %v689
    %755 = vmatpush.msra.mxu0 %v688
    %756 = vmatpush.msra.mxu0 %v687
    %757 = vmatpush.msra.mxu0 %v686
    %758 = vmatpush.msra.mxu0 %v685
    %759 = vmatpush.msra.mxu0 %v684
    %760 = vmatpush.msra.mxu0 %v683
    %761 = vmatpush.msra.mxu0 %v682
    %762 = vmatpush.msra.mxu0 %v681
    %763 = vmatpush.msra.mxu0 %v680
    %764 = vmatpush.msra.mxu0 %v679
    %765 = vmatpush.msra.mxu0 %v678
    %766 = vmatpush.msra.mxu0 %v677
    %767 = vmatpush.msra.mxu0 %v676
    %768 = vmatpush.msra.mxu0 %v675
    %769 = vmatpush.msra.mxu0 %v674
    %770 = vmatmul.f32.gmra.mxu0 %v634
    %v771 = vpop.f32.mrf.mxu0
    %v772 = vadd.f32 0.0, %v771
    %773 = vmatmul.f32.gmra.mxu0 %v639
    %v774 = vpop.f32.mrf.mxu0
    %v775 = vadd.f32 0.0, %v774
    %776 = vmatmul.f32.gmra.mxu0 %v644
    %v777 = vpop.f32.mrf.mxu0
    %v778 = vadd.f32 0.0, %v777
    %779 = vmatmul.f32.gmra.mxu0 %v649
    %v780 = vpop.f32.mrf.mxu0
    %v781 = vadd.f32 0.0, %v780
    %782 = vmatmul.f32.gmra.mxu0 %v654
    %v783 = vpop.f32.mrf.mxu0
    %v784 = vadd.f32 0.0, %v783
    %785 = vmatmul.f32.gmra.mxu0 %v659
    %v786 = vpop.f32.mrf.mxu0
    %v787 = vadd.f32 0.0, %v786
    %788 = vmatmul.f32.gmra.mxu0 %v664
    %v789 = vpop.f32.mrf.mxu0
    %v790 = vadd.f32 0.0, %v789
    %791 = vmatmul.f32.gmra.mxu0 %v669
    %v792 = vpop.f32.mrf.mxu0
    %v793 = vadd.f32 0.0, %v792
    %794 = vdwg.mxu0
    %795 = vmatpush.msra.mxu0 %v705
    %796 = vmatpush.msra.mxu0 %v704
    %797 = vmatpush.msra.mxu0 %v703
    %798 = vmatpush.msra.mxu0 %v702
    %799 = vmatpush.msra.mxu0 %v701
    %800 = vmatpush.msra.mxu0 %v700
    %801 = vmatpush.msra.mxu0 %v699
    %802 = vmatpush.msra.mxu0 %v698
    %803 = vmatpush.msra.mxu0 %v697
    %804 = vmatpush.msra.mxu0 %v696
    %805 = vmatpush.msra.mxu0 %v695
    %806 = vmatpush.msra.mxu0 %v694
    %807 = vmatpush.msra.mxu0 %v693
    %808 = vmatpush.msra.mxu0 %v692
    %809 = vmatpush.msra.mxu0 %v691
    %810 = vmatpush.msra.mxu0 %v690
    %811 = vmatmul.f32.gmra.mxu0 %v635
    %v812 = vpop.f32.mrf.mxu0
    %v813 = vadd.f32 %v772, %v812
    %814 = vmatmul.f32.gmra.mxu0 %v640
    %v815 = vpop.f32.mrf.mxu0
    %v816 = vadd.f32 %v775, %v815
    %817 = vmatmul.f32.gmra.mxu0 %v645
    %v818 = vpop.f32.mrf.mxu0
    %v819 = vadd.f32 %v778, %v818
    %820 = vmatmul.f32.gmra.mxu0 %v650
    %v821 = vpop.f32.mrf.mxu0
    %v822 = vadd.f32 %v781, %v821
    %823 = vmatmul.f32.gmra.mxu0 %v655
    %v824 = vpop.f32.mrf.mxu0
    %v825 = vadd.f32 %v784, %v824
    %826 = vmatmul.f32.gmra.mxu0 %v660
    %v827 = vpop.f32.mrf.mxu0
    %v828 = vadd.f32 %v787, %v827
    %829 = vmatmul.f32.gmra.mxu0 %v665
    %v830 = vpop.f32.mrf.mxu0
    %v831 = vadd.f32 %v790, %v830
    %832 = vmatmul.f32.gmra.mxu0 %v670
    %v833 = vpop.f32.mrf.mxu0
    %v834 = vadd.f32 %v793, %v833
    %835 = vdwg.mxu0
    %836 = vmatpush.msra.mxu0 %v721
    %837 = vmatpush.msra.mxu0 %v720
    %838 = vmatpush.msra.mxu0 %v719
    %839 = vmatpush.msra.mxu0 %v718
    %840 = vmatpush.msra.mxu0 %v717
    %841 = vmatpush.msra.mxu0 %v716
    %842 = vmatpush.msra.mxu0 %v715
    %843 = vmatpush.msra.mxu0 %v714
    %844 = vmatpush.msra.mxu0 %v713
    %845 = vmatpush.msra.mxu0 %v712
    %846 = vmatpush.msra.mxu0 %v711
    %847 = vmatpush.msra.mxu0 %v710
    %848 = vmatpush.msra.mxu0 %v709
    %849 = vmatpush.msra.mxu0 %v708
    %850 = vmatpush.msra.mxu0 %v707
    %851 = vmatpush.msra.mxu0 %v706
    %852 = vmatmul.f32.gmra.mxu0 %v636
    %v853 = vpop.f32.mrf.mxu0
    %v854 = vadd.f32 %v813, %v853
    %855 = vmatmul.f32.gmra.mxu0 %v641
    %v856 = vpop.f32.mrf.mxu0
    %v857 = vadd.f32 %v816, %v856
    %858 = vmatmul.f32.gmra.mxu0 %v646
    %v859 = vpop.f32.mrf.mxu0
    %v860 = vadd.f32 %v819, %v859
    %861 = vmatmul.f32.gmra.mxu0 %v651
    %v862 = vpop.f32.mrf.mxu0
    %v863 = vadd.f32 %v822, %v862
    %864 = vmatmul.f32.gmra.mxu0 %v656
    %v865 = vpop.f32.mrf.mxu0
    %v866 = vadd.f32 %v825, %v865
    %867 = vmatmul.f32.gmra.mxu0 %v661
    %v868 = vpop.f32.mrf.mxu0
    %v869 = vadd.f32 %v828, %v868
    %870 = vmatmul.f32.gmra.mxu0 %v666
    %v871 = vpop.f32.mrf.mxu0
    %v872 = vadd.f32 %v831, %v871
    %873 = vmatmul.f32.gmra.mxu0 %v671
    %v874 = vpop.f32.mrf.mxu0
    %v875 = vadd.f32 %v834, %v874
    %876 = vdwg.mxu0
    %877 = vmatpush.msra.mxu0 %v737
    %878 = vmatpush.msra.mxu0 %v736
    %879 = vmatpush.msra.mxu0 %v735
    %880 = vmatpush.msra.mxu0 %v734
    %881 = vmatpush.msra.mxu0 %v733
    %882 = vmatpush.msra.mxu0 %v732
    %883 = vmatpush.msra.mxu0 %v731
    %884 = vmatpush.msra.mxu0 %v730
    %885 = vmatpush.msra.mxu0 %v729
    %886 = vmatpush.msra.mxu0 %v728
    %887 = vmatpush.msra.mxu0 %v727
    %888 = vmatpush.msra.mxu0 %v726
    %889 = vmatpush.msra.mxu0 %v725
    %890 = vmatpush.msra.mxu0 %v724
    %891 = vmatpush.msra.mxu0 %v723
    %892 = vmatpush.msra.mxu0 %v722
    %893 = vmatmul.f32.gmra.mxu0 %v637
    %v894 = vpop.f32.mrf.mxu0
    %v895 = vadd.f32 %v854, %v894
    %896 = vmatmul.f32.gmra.mxu0 %v642
    %v897 = vpop.f32.mrf.mxu0
    %v898 = vadd.f32 %v857, %v897
    %899 = vmatmul.f32.gmra.mxu0 %v647
    %v900 = vpop.f32.mrf.mxu0
    %v901 = vadd.f32 %v860, %v900
    %902 = vmatmul.f32.gmra.mxu0 %v652
    %v903 = vpop.f32.mrf.mxu0
    %v904 = vadd.f32 %v863, %v903
    %905 = vmatmul.f32.gmra.mxu0 %v657
    %v906 = vpop.f32.mrf.mxu0
    %v907 = vadd.f32 %v866, %v906
    %908 = vmatmul.f32.gmra.mxu0 %v662
    %v909 = vpop.f32.mrf.mxu0
    %v910 = vadd.f32 %v869, %v909
    %911 = vmatmul.f32.gmra.mxu0 %v667
    %v912 = vpop.f32.mrf.mxu0
    %v913 = vadd.f32 %v872, %v912
    %914 = vmatmul.f32.gmra.mxu0 %v672
    %v915 = vpop.f32.mrf.mxu0
    %v916 = vadd.f32 %v875, %v915
    %917 = vdwg.mxu0
    %918 = vmatpush.msra.mxu0 %v753
    %919 = vmatpush.msra.mxu0 %v752
    %920 = vmatpush.msra.mxu0 %v751
    %921 = vmatpush.msra.mxu0 %v750
    %922 = vmatpush.msra.mxu0 %v749
    %923 = vmatpush.msra.mxu0 %v748
    %924 = vmatpush.msra.mxu0 %v747
    %925 = vmatpush.msra.mxu0 %v746
    %926 = vmatpush.msra.mxu0 %v745
    %927 = vmatpush.msra.mxu0 %v744
    %928 = vmatpush.msra.mxu0 %v743
    %929 = vmatpush.msra.mxu0 %v742
    %930 = vmatpush.msra.mxu0 %v741
    %931 = vmatpush.msra.mxu0 %v740
    %932 = vmatpush.msra.mxu0 %v739
    %933 = vmatpush.msra.mxu0 %v738
    %934 = vmatmul.f32.gmra.mxu0 %v638
    %v935 = vpop.f32.mrf.mxu0
    %v936 = vadd.f32 %v895, %v935
    %937 = vmatmul.f32.gmra.mxu0 %v643
    %v938 = vpop.f32.mrf.mxu0
    %v939 = vadd.f32 %v898, %v938
    %940 = vmatmul.f32.gmra.mxu0 %v648
    %v941 = vpop.f32.mrf.mxu0
    %v942 = vadd.f32 %v901, %v941
    %943 = vmatmul.f32.gmra.mxu0 %v653
    %v944 = vpop.f32.mrf.mxu0
    %v945 = vadd.f32 %v904, %v944
    %946 = vmatmul.f32.gmra.mxu0 %v658
    %v947 = vpop.f32.mrf.mxu0
    %v948 = vadd.f32 %v907, %v947
    %949 = vmatmul.f32.gmra.mxu0 %v663
    %v950 = vpop.f32.mrf.mxu0
    %v951 = vadd.f32 %v910, %v950
    %952 = vmatmul.f32.gmra.mxu0 %v668
    %v953 = vpop.f32.mrf.mxu0
    %v954 = vadd.f32 %v913, %v953
    %955 = vmatmul.f32.gmra.mxu0 %v673
    %v956 = vpop.f32.mrf.mxu0
    %v957 = vadd.f32 %v916, %v956
    %958 = vdwg.mxu0
    %959 = vst [vmem:[#allocation8] sm:$0xff] %v936
    %960 = vst [vmem:[#allocation8 + $0x8] sm:$0xff] %v939
    %961 = vst [vmem:[#allocation8 + $0x10] sm:$0xff] %v942
    %962 = vst [vmem:[#allocation8 + $0x18] sm:$0xff] %v945
    %963 = vst [vmem:[#allocation8 + $0x20] sm:$0xff] %v948
    %964 = vst [vmem:[#allocation8 + $0x28] sm:$0xff] %v951
    %965 = vst [vmem:[#allocation8 + $0x30] sm:$0xff] %v954
    %966 = vst [vmem:[#allocation8 + $0x38] sm:$0xff] %v957
    // Predicated region
    $region42: #{tpu_custom_call.1} parent=1 // pred_check
      _
    $region43: #{tpu_custom_call.1} parent=1 // pred_check_branch
      %968 = sbr.rel (0) target = $region45
    $region44: #{tpu_custom_call.1} parent=1 // pred_region
      %970 = vsyncadd [#allocation4], 0
      %s971 = sshll.u32 [#allocation8], 4
      %s972 = int_to_ptr.vmem [resolvable:$true] %s971
      %s973 = sshll.u32 %s7, 4
      %s974 = int_to_ptr.hbm [resolvable:$true] %s973
      %979 = dma.vmem_to_hbm [thread:$0]  %s972, 1024, %s974, [#allocation4], 128, 128, 8
    $region45: #{tpu_custom_call.1} parent=1 // pred_fallthru
      _
    // Predicated region
    $region46: #{tpu_custom_call.1} parent=1 // pred_check
      _
    $region47: #{tpu_custom_call.1} parent=1 // pred_check_branch
      %981 = sbr.rel (0) target = $region49
    $region48: #{tpu_custom_call.1} parent=1 // pred_region
      %983 = dma.done [#allocation4], 1024
    $region49: #{tpu_custom_call.1} parent=1 // pred_fallthru
      _
    %984 = vsyncpa [#allocation3], 1
    %985 = vsyncpa [#allocation6], 1
    %986 = vsyncpa [#allocation4], 1

// kernel: tpu_custom_call.1
$region0: #{tpu_custom_call.1}
  #allocation0 [shape = 'u32[]', space=smem, size = 0x4, offset = 0x4, fixed_abs, tag = 'smem constant byte address 0x4 - core index']
  #allocation1 [shape = 'u32[72,128]{1,0:T(1,128)}', space=vmem, size = 0x9000, scoped, tag = 'internal scratch']
  %s0 = inlined_call_operand.vmem [shape: f32[64,32], index: 0, kind: input, shape index: {}]
  %s1 = inlined_call_operand.vmem [shape: f32[64,64], index: 1, kind: input, shape index: {}]
  %s2 = inlined_call_operand.hbm [shape: f32[32,640], index: 2, kind: input, shape index: {}]
  %s3 = inlined_call_operand.hbm [shape: f32[64,640], index: 3, kind: input, shape index: {}]
  %s4 = inlined_call_operand.vmem [shape: f32[1,640], index: 4, kind: input, shape index: {}]
  %s5 = inlined_call_operand.vmem [shape: f32[1,640], index: 5, kind: input, shape index: {}]
  %s6 = inlined_call_operand.hbm [shape: f32[640,128], index: 6, kind: input, shape index: {}]
  %s7 = inlined_call_operand.hbm [shape: f32[64,128], index: 7, kind: output, shape index: {}]
  %s8 = sld [smem:[#allocation0]]
  $region50: #{tpu_custom_call.1} parent=0
    _
  %s10 = ssub.s32 1, %s8
  %s11 = scalar_select 0, %s10, %s8
  $region1: #{tpu_custom_call.1} parent=0
    #allocation2 [shape = 'u8[81920]{0}', space=vmem, size = 0x14000, scoped, tag = 'input window, operand 2, single buffered']
    #allocation3 [shape = 's32[1]{0}', space=sflag, size = 0x4, scoped, tag = 'scoped memory for tpu_custom_call.1']
    #allocation4 [shape = 's32[1]{0}', space=sflag, size = 0x4, scoped, tag = 'scoped memory for tpu_custom_call.1']
    #allocation5 [shape = 'u8[163840]{0}', space=vmem, size = 0x28000, scoped, tag = 'input window, operand 3, single buffered']
    #allocation6 [shape = 's32[1]{0}', space=sflag, size = 0x4, scoped, tag = 'scoped memory for tpu_custom_call.1']
    #allocation7 [shape = 'u8[327680]{0}', space=vmem, size = 0x50000, scoped, tag = 'input window, operand 6, single buffered']
    #allocation8 [shape = 'u8[32768]{0}', space=vmem, size = 0x8000, scoped, tag = 'output window, operand 0, single buffered']
    %12 = vsyncpa [#allocation3], 0
    %13 = vsyncpa [#allocation6], 0
    %14 = vsyncpa [#allocation4], 0
    // Predicated region
    $region2: #{tpu_custom_call.1} parent=1 // pred_check
      _
    $region3: #{tpu_custom_call.1} parent=1 // pred_check_branch
      %16 = sbr.rel (0) target = $region5
    $region4: #{tpu_custom_call.1} parent=1 // pred_region
      _
    $region5: #{tpu_custom_call.1} parent=1 // pred_fallthru
      _
    // Predicated region
    $region6: #{tpu_custom_call.1} parent=1 // pred_check
      _
    $region7: #{tpu_custom_call.1} parent=1 // pred_check_branch
      %18 = sbr.rel (0) target = $region9
    $region8: #{tpu_custom_call.1} parent=1 // pred_region
      _
    $region9: #{tpu_custom_call.1} parent=1 // pred_fallthru
      _
    // Predicated region
    $region10: #{tpu_custom_call.1} parent=1 // pred_check
      _
    $region11: #{tpu_custom_call.1} parent=1 // pred_check_branch
      %20 = sbr.rel (0) target = $region13
    $region12: #{tpu_custom_call.1} parent=1 // pred_region
      %22 = vsyncadd [#allocation3], 0
      %s23 = sshll.u32 %s2, 4
      %s24 = int_to_ptr.hbm [resolvable:$true] %s23
      %s25 = sshll.u32 [#allocation2], 4
      %s26 = int_to_ptr.vmem [resolvable:$true] %s25
      %31 = dma.hbm_to_vmem [thread:$0]  %s24, 2560, %s26, [#allocation3], 640, 640, 40
    $region13: #{tpu_custom_call.1} parent=1 // pred_fallthru
      _
    // Predicated region
    $region14: #{tpu_custom_call.1} parent=1 // pred_check
      _
    $region15: #{tpu_custom_call.1} parent=1 // pred_check_branch
      %33 = sbr.rel (0) target = $region17
    $region16: #{tpu_custom_call.1} parent=1 // pred_region
      %35 = vsyncadd [#allocation6], 0
      %s36 = sshll.u32 %s3, 4
      %s37 = int_to_ptr.hbm [resolvable:$true] %s36
      %s38 = sshll.u32 [#allocation5], 4
      %s39 = int_to_ptr.vmem [resolvable:$true] %s38
      %44 = dma.hbm_to_vmem [thread:$0]  %s37, 5120, %s39, [#allocation6], 640, 640, 40
    $region17: #{tpu_custom_call.1} parent=1 // pred_fallthru
      _
    // Predicated region
    $region18: #{tpu_custom_call.1} parent=1 // pred_check
      _
    $region19: #{tpu_custom_call.1} parent=1 // pred_check_branch
      %46 = sbr.rel (0) target = $region21
    $region20: #{tpu_custom_call.1} parent=1 // pred_region
      _
    $region21: #{tpu_custom_call.1} parent=1 // pred_fallthru
      _
    // Predicated region
    $region22: #{tpu_custom_call.1} parent=1 // pred_check
      _
    $region23: #{tpu_custom_call.1} parent=1 // pred_check_branch
      %48 = sbr.rel (0) target = $region25
    $region24: #{tpu_custom_call.1} parent=1 // pred_region
      _
    $region25: #{tpu_custom_call.1} parent=1 // pred_fallthru
      _
    // Predicated region
    $region26: #{tpu_custom_call.1} parent=1 // pred_check
      _
    $region27: #{tpu_custom_call.1} parent=1 // pred_check_branch
      %50 = sbr.rel (0) target = $region29
    $region28: #{tpu_custom_call.1} parent=1 // pred_region
      %52 = vsyncadd [#allocation6], 0
      %s53 = sshll.u32 %s6, 4
      %s54 = int_to_ptr.hbm [resolvable:$true] %s53
      %s55 = sshll.u32 [#allocation7], 4
      %s56 = int_to_ptr.vmem [resolvable:$true] %s55
      %61 = dma.hbm_to_vmem [thread:$0]  %s54, 10240, %s56, [#allocation6], 128, 128, 8
    $region29: #{tpu_custom_call.1} parent=1 // pred_fallthru
      _
    // Predicated region
    $region30: #{tpu_custom_call.1} parent=1 // pred_check
      _
    $region31: #{tpu_custom_call.1} parent=1 // pred_check_branch
      %63 = sbr.rel (0) target = $region33
    $region32: #{tpu_custom_call.1} parent=1 // pred_region
      %65 = dma.done [#allocation3], 2560
    $region33: #{tpu_custom_call.1} parent=1 // pred_fallthru
      _
    // Predicated region
    $region34: #{tpu_custom_call.1} parent=1 // pred_check
      _
    $region35: #{tpu_custom_call.1} parent=1 // pred_check_branch
      %67 = sbr.rel (0) target = $region37
    $region36: #{tpu_custom_call.1} parent=1 // pred_region
      %69 = dma.done [#allocation6], 5120
    $region37: #{tpu_custom_call.1} parent=1 // pred_fallthru
      _
    // Predicated region
    $region38: #{tpu_custom_call.1} parent=1 // pred_check
      _
    $region39: #{tpu_custom_call.1} parent=1 // pred_check_branch
      %71 = sbr.rel (0) target = $region41
    $region40: #{tpu_custom_call.1} parent=1 // pred_region
      %73 = dma.done [#allocation6], 10240
    $region41: #{tpu_custom_call.1} parent=1 // pred_fallthru
      _
    %v74 = vld [vmem:[%s0] sm:$0xff]
    %v75 = vld [vmem:[%s0 + $0x8] sm:$0xff]
    %v76 = vld [vmem:[%s0 + $0x10] sm:$0xff]
    %v77 = vld [vmem:[%s0 + $0x18] sm:$0xff]
    %v78 = vld [vmem:[%s0 + $0x20] sm:$0xff]
    %v79 = vld [vmem:[%s0 + $0x28] sm:$0xff]
    %v80 = vld [vmem:[%s0 + $0x30] sm:$0xff]
    %v81 = vld [vmem:[%s0 + $0x38] sm:$0xff]
    %v82 = vld [vmem:[#allocation2] sm:$0xff]
    %v83 = vld [vmem:[#allocation2 + $0x8] sm:$0xff]
    %v84 = vld [vmem:[#allocation2 + $0x10] sm:$0xff]
    %v85 = vld [vmem:[#allocation2 + $0x18] sm:$0xff]
    %v86 = vld [vmem:[#allocation2 + $0x20] sm:$0xff]
    %v87 = vld [vmem:[#allocation2 + $0x28] sm:$0xff]
    %v88 = vld [vmem:[#allocation2 + $0x30] sm:$0xff]
    %v89 = vld [vmem:[#allocation2 + $0x38] sm:$0xff]
    %v90 = vld [vmem:[#allocation2 + $0x40] sm:$0xff]
    %v91 = vld [vmem:[#allocation2 + $0x48] sm:$0xff]
    %v92 = vld [vmem:[#allocation2 + $0x50] sm:$0xff]
    %v93 = vld [vmem:[#allocation2 + $0x58] sm:$0xff]
    %v94 = vld [vmem:[#allocation2 + $0x60] sm:$0xff]
    %v95 = vld [vmem:[#allocation2 + $0x68] sm:$0xff]
    %v96 = vld [vmem:[#allocation2 + $0x70] sm:$0xff]
    %v97 = vld [vmem:[#allocation2 + $0x78] sm:$0xff]
    %v98 = vld [vmem:[#allocation2 + $0x80] sm:$0xff]
    %v99 = vld [vmem:[#allocation2 + $0x88] sm:$0xff]
    %v100 = vld [vmem:[#allocation2 + $0x90] sm:$0xff]
    %v101 = vld [vmem:[#allocation2 + $0x98] sm:$0xff]
    %v102 = vld [vmem:[%s4] sm:$0x1f]
    %v104 = vperm.slane %v102, 0
    %v105 = vperm.slane %v102, 1
    %v106 = vperm.slane %v102, 2
    %v107 = vperm.slane %v102, 3
    %v108 = vperm.slane %v102, 4
    %vm114 = vcmask 261120
    %v116 = vsel %vm114, %v74, 0
    %v119 = vsel %vm114, %v75, 0
    %v122 = vsel %vm114, %v76, 0
    %v125 = vsel %vm114, %v77, 0
    %v128 = vsel %vm114, %v78, 0
    %v131 = vsel %vm114, %v79, 0
    %v134 = vsel %vm114, %v80, 0
    %v137 = vsel %vm114, %v81, 0
    %139 = vmatpush.msra.mxu0 0.0
    %140 = vmatpush.msra.mxu0 0.0
    %141 = vmatpush.msra.mxu0 0.0
    %142 = vmatpush.msra.mxu0 0.0
    %143 = vmatpush.msra.mxu0 0.0
    %144 = vmatpush.msra.mxu0 0.0
    %145 = vmatpush.msra.mxu0 0.0
    %146 = vmatpush.msra.mxu0 0.0
    %147 = vmatpush.msra.mxu0 0.0
    %148 = vmatpush.msra.mxu0 0.0
    %149 = vmatpush.msra.mxu0 0.0
    %150 = vmatpush.msra.mxu0 0.0
    %151 = vmatpush.msra.mxu0 %v97
    %152 = vmatpush.msra.mxu0 %v92
    %153 = vmatpush.msra.mxu0 %v87
    %154 = vmatpush.msra.mxu0 %v82
    %155 = vmatmul.f32.gmra.mxu0 %v116
    %v156 = vpop.f32.mrf.mxu0
    %v157 = vadd.f32 %v104, %v156
    %158 = vmatmul.f32.gmra.mxu0 %v119
    %v159 = vpop.f32.mrf.mxu0
    %v160 = vadd.f32 %v104, %v159
    %161 = vmatmul.f32.gmra.mxu0 %v122
    %v162 = vpop.f32.mrf.mxu0
    %v163 = vadd.f32 %v104, %v162
    %164 = vmatmul.f32.gmra.mxu0 %v125
    %v165 = vpop.f32.mrf.mxu0
    %v166 = vadd.f32 %v104, %v165
    %167 = vmatmul.f32.gmra.mxu0 %v128
    %v168 = vpop.f32.mrf.mxu0
    %v169 = vadd.f32 %v104, %v168
    %170 = vmatmul.f32.gmra.mxu0 %v131
    %v171 = vpop.f32.mrf.mxu0
    %v172 = vadd.f32 %v104, %v171
    %173 = vmatmul.f32.gmra.mxu0 %v134
    %v174 = vpop.f32.mrf.mxu0
    %v175 = vadd.f32 %v104, %v174
    %176 = vmatmul.f32.gmra.mxu0 %v137
    %v177 = vpop.f32.mrf.mxu0
    %v178 = vadd.f32 %v104, %v177
    %179 = vdwg.mxu0
    %180 = vmatpush.msra.mxu0 0.0
    %181 = vmatpush.msra.mxu0 0.0
    %182 = vmatpush.msra.mxu0 0.0
    %183 = vmatpush.msra.mxu0 0.0
    %184 = vmatpush.msra.mxu0 0.0
    %185 = vmatpush.msra.mxu0 0.0
    %186 = vmatpush.msra.mxu0 0.0
    %187 = vmatpush.msra.mxu0 0.0
    %188 = vmatpush.msra.mxu0 0.0
    %189 = vmatpush.msra.mxu0 0.0
    %190 = vmatpush.msra.mxu0 0.0
    %191 = vmatpush.msra.mxu0 0.0
    %192 = vmatpush.msra.mxu0 %v98
    %193 = vmatpush.msra.mxu0 %v93
    %194 = vmatpush.msra.mxu0 %v88
    %195 = vmatpush.msra.mxu0 %v83
    %196 = vmatmul.f32.gmra.mxu0 %v116
    %v197 = vpop.f32.mrf.mxu0
    %v198 = vadd.f32 %v105, %v197
    %199 = vmatmul.f32.gmra.mxu0 %v119
    %v200 = vpop.f32.mrf.mxu0
    %v201 = vadd.f32 %v105, %v200
    %202 = vmatmul.f32.gmra.mxu0 %v122
    %v203 = vpop.f32.mrf.mxu0
    %v204 = vadd.f32 %v105, %v203
    %205 = vmatmul.f32.gmra.mxu0 %v125
    %v206 = vpop.f32.mrf.mxu0
    %v207 = vadd.f32 %v105, %v206
    %208 = vmatmul.f32.gmra.mxu0 %v128
    %v209 = vpop.f32.mrf.mxu0
    %v210 = vadd.f32 %v105, %v209
    %211 = vmatmul.f32.gmra.mxu0 %v131
    %v212 = vpop.f32.mrf.mxu0
    %v213 = vadd.f32 %v105, %v212
    %214 = vmatmul.f32.gmra.mxu0 %v134
    %v215 = vpop.f32.mrf.mxu0
    %v216 = vadd.f32 %v105, %v215
    %217 = vmatmul.f32.gmra.mxu0 %v137
    %v218 = vpop.f32.mrf.mxu0
    %v219 = vadd.f32 %v105, %v218
    %220 = vdwg.mxu0
    %221 = vmatpush.msra.mxu0 0.0
    %222 = vmatpush.msra.mxu0 0.0
    %223 = vmatpush.msra.mxu0 0.0
    %224 = vmatpush.msra.mxu0 0.0
    %225 = vmatpush.msra.mxu0 0.0
    %226 = vmatpush.msra.mxu0 0.0
    %227 = vmatpush.msra.mxu0 0.0
    %228 = vmatpush.msra.mxu0 0.0
    %229 = vmatpush.msra.mxu0 0.0
    %230 = vmatpush.msra.mxu0 0.0
    %231 = vmatpush.msra.mxu0 0.0
    %232 = vmatpush.msra.mxu0 0.0
    %233 = vmatpush.msra.mxu0 %v99
    %234 = vmatpush.msra.mxu0 %v94
    %235 = vmatpush.msra.mxu0 %v89
    %236 = vmatpush.msra.mxu0 %v84
    %237 = vmatmul.f32.gmra.mxu0 %v116
    %v238 = vpop.f32.mrf.mxu0
    %v239 = vadd.f32 %v106, %v238
    %240 = vmatmul.f32.gmra.mxu0 %v119
    %v241 = vpop.f32.mrf.mxu0
    %v242 = vadd.f32 %v106, %v241
    %243 = vmatmul.f32.gmra.mxu0 %v122
    %v244 = vpop.f32.mrf.mxu0
    %v245 = vadd.f32 %v106, %v244
    %246 = vmatmul.f32.gmra.mxu0 %v125
    %v247 = vpop.f32.mrf.mxu0
    %v248 = vadd.f32 %v106, %v247
    %249 = vmatmul.f32.gmra.mxu0 %v128
    %v250 = vpop.f32.mrf.mxu0
    %v251 = vadd.f32 %v106, %v250
    %252 = vmatmul.f32.gmra.mxu0 %v131
    %v253 = vpop.f32.mrf.mxu0
    %v254 = vadd.f32 %v106, %v253
    %255 = vmatmul.f32.gmra.mxu0 %v134
    %v256 = vpop.f32.mrf.mxu0
    %v257 = vadd.f32 %v106, %v256
    %258 = vmatmul.f32.gmra.mxu0 %v137
    %v259 = vpop.f32.mrf.mxu0
    %v260 = vadd.f32 %v106, %v259
    %261 = vdwg.mxu0
    %262 = vmatpush.msra.mxu0 0.0
    %263 = vmatpush.msra.mxu0 0.0
    %264 = vmatpush.msra.mxu0 0.0
    %265 = vmatpush.msra.mxu0 0.0
    %266 = vmatpush.msra.mxu0 0.0
    %267 = vmatpush.msra.mxu0 0.0
    %268 = vmatpush.msra.mxu0 0.0
    %269 = vmatpush.msra.mxu0 0.0
    %270 = vmatpush.msra.mxu0 0.0
    %271 = vmatpush.msra.mxu0 0.0
    %272 = vmatpush.msra.mxu0 0.0
    %273 = vmatpush.msra.mxu0 0.0
    %274 = vmatpush.msra.mxu0 %v100
    %275 = vmatpush.msra.mxu0 %v95
    %276 = vmatpush.msra.mxu0 %v90
    %277 = vmatpush.msra.mxu0 %v85
    %278 = vmatmul.f32.gmra.mxu0 %v116
    %v279 = vpop.f32.mrf.mxu0
    %v280 = vadd.f32 %v107, %v279
    %281 = vmatmul.f32.gmra.mxu0 %v119
    %v282 = vpop.f32.mrf.mxu0
    %v283 = vadd.f32 %v107, %v282
    %284 = vmatmul.f32.gmra.mxu0 %v122
    %v285 = vpop.f32.mrf.mxu0
    %v286 = vadd.f32 %v107, %v285
    %287 = vmatmul.f32.gmra.mxu0 %v125
    %v288 = vpop.f32.mrf.mxu0
    %v289 = vadd.f32 %v107, %v288
    %290 = vmatmul.f32.gmra.mxu0 %v128
    %v291 = vpop.f32.mrf.mxu0
    %v292 = vadd.f32 %v107, %v291
    %293 = vmatmul.f32.gmra.mxu0 %v131
    %v294 = vpop.f32.mrf.mxu0
    %v295 = vadd.f32 %v107, %v294
    %296 = vmatmul.f32.gmra.mxu0 %v134
    %v297 = vpop.f32.mrf.mxu0
    %v298 = vadd.f32 %v107, %v297
    %299 = vmatmul.f32.gmra.mxu0 %v137
    %v300 = vpop.f32.mrf.mxu0
    %v301 = vadd.f32 %v107, %v300
    %302 = vdwg.mxu0
    %303 = vmatpush.msra.mxu0 0.0
    %304 = vmatpush.msra.mxu0 0.0
    %305 = vmatpush.msra.mxu0 0.0
    %306 = vmatpush.msra.mxu0 0.0
    %307 = vmatpush.msra.mxu0 0.0
    %308 = vmatpush.msra.mxu0 0.0
    %309 = vmatpush.msra.mxu0 0.0
    %310 = vmatpush.msra.mxu0 0.0
    %311 = vmatpush.msra.mxu0 0.0
    %312 = vmatpush.msra.mxu0 0.0
    %313 = vmatpush.msra.mxu0 0.0
    %314 = vmatpush.msra.mxu0 0.0
    %315 = vmatpush.msra.mxu0 %v101
    %316 = vmatpush.msra.mxu0 %v96
    %317 = vmatpush.msra.mxu0 %v91
    %318 = vmatpush.msra.mxu0 %v86
    %319 = vmatmul.f32.gmra.mxu0 %v116
    %v320 = vpop.f32.mrf.mxu0
    %v321 = vadd.f32 %v108, %v320
    %322 = vmatmul.f32.gmra.mxu0 %v119
    %v323 = vpop.f32.mrf.mxu0
    %v324 = vadd.f32 %v108, %v323
    %325 = vmatmul.f32.gmra.mxu0 %v122
    %v326 = vpop.f32.mrf.mxu0
    %v327 = vadd.f32 %v108, %v326
    %328 = vmatmul.f32.gmra.mxu0 %v125
    %v329 = vpop.f32.mrf.mxu0
    %v330 = vadd.f32 %v108, %v329
    %331 = vmatmul.f32.gmra.mxu0 %v128
    %v332 = vpop.f32.mrf.mxu0
    %v333 = vadd.f32 %v108, %v332
    %334 = vmatmul.f32.gmra.mxu0 %v131
    %v335 = vpop.f32.mrf.mxu0
    %v336 = vadd.f32 %v108, %v335
    %337 = vmatmul.f32.gmra.mxu0 %v134
    %v338 = vpop.f32.mrf.mxu0
    %v339 = vadd.f32 %v108, %v338
    %340 = vmatmul.f32.gmra.mxu0 %v137
    %v341 = vpop.f32.mrf.mxu0
    %v342 = vadd.f32 %v108, %v341
    %343 = vdwg.mxu0
    %v344 = vld [vmem:[%s1] sm:$0xff]
    %v345 = vld [vmem:[%s1 + $0x8] sm:$0xff]
    %v346 = vld [vmem:[%s1 + $0x10] sm:$0xff]
    %v347 = vld [vmem:[%s1 + $0x18] sm:$0xff]
    %v348 = vld [vmem:[%s1 + $0x20] sm:$0xff]
    %v349 = vld [vmem:[%s1 + $0x28] sm:$0xff]
    %v350 = vld [vmem:[%s1 + $0x30] sm:$0xff]
    %v351 = vld [vmem:[%s1 + $0x38] sm:$0xff]
    %v352 = vld [vmem:[#allocation5] sm:$0xff]
    %v353 = vld [vmem:[#allocation5 + $0x8] sm:$0xff]
    %v354 = vld [vmem:[#allocation5 + $0x10] sm:$0xff]
    %v355 = vld [vmem:[#allocation5 + $0x18] sm:$0xff]
    %v356 = vld [vmem:[#allocation5 + $0x20] sm:$0xff]
    %v357 = vld [vmem:[#allocation5 + $0x28] sm:$0xff]
    %v358 = vld [vmem:[#allocation5 + $0x30] sm:$0xff]
    %v359 = vld [vmem:[#allocation5 + $0x38] sm:$0xff]
    %v360 = vld [vmem:[#allocation5 + $0x40] sm:$0xff]
    %v361 = vld [vmem:[#allocation5 + $0x48] sm:$0xff]
    %v362 = vld [vmem:[#allocation5 + $0x50] sm:$0xff]
    %v363 = vld [vmem:[#allocation5 + $0x58] sm:$0xff]
    %v364 = vld [vmem:[#allocation5 + $0x60] sm:$0xff]
    %v365 = vld [vmem:[#allocation5 + $0x68] sm:$0xff]
    %v366 = vld [vmem:[#allocation5 + $0x70] sm:$0xff]
    %v367 = vld [vmem:[#allocation5 + $0x78] sm:$0xff]
    %v368 = vld [vmem:[#allocation5 + $0x80] sm:$0xff]
    %v369 = vld [vmem:[#allocation5 + $0x88] sm:$0xff]
    %v370 = vld [vmem:[#allocation5 + $0x90] sm:$0xff]
    %v371 = vld [vmem:[#allocation5 + $0x98] sm:$0xff]
    %v372 = vld [vmem:[#allocation5 + $0xa0] sm:$0xff]
    %v373 = vld [vmem:[#allocation5 + $0xa8] sm:$0xff]
    %v374 = vld [vmem:[#allocation5 + $0xb0] sm:$0xff]
    %v375 = vld [vmem:[#allocation5 + $0xb8] sm:$0xff]
    %v376 = vld [vmem:[#allocation5 + $0xc0] sm:$0xff]
    %v377 = vld [vmem:[#allocation5 + $0xc8] sm:$0xff]
    %v378 = vld [vmem:[#allocation5 + $0xd0] sm:$0xff]
    %v379 = vld [vmem:[#allocation5 + $0xd8] sm:$0xff]
    %v380 = vld [vmem:[#allocation5 + $0xe0] sm:$0xff]
    %v381 = vld [vmem:[#allocation5 + $0xe8] sm:$0xff]
    %v382 = vld [vmem:[#allocation5 + $0xf0] sm:$0xff]
    %v383 = vld [vmem:[#allocation5 + $0xf8] sm:$0xff]
    %v384 = vld [vmem:[#allocation5 + $0x100] sm:$0xff]
    %v385 = vld [vmem:[#allocation5 + $0x108] sm:$0xff]
    %v386 = vld [vmem:[#allocation5 + $0x110] sm:$0xff]
    %v387 = vld [vmem:[#allocation5 + $0x118] sm:$0xff]
    %v388 = vld [vmem:[#allocation5 + $0x120] sm:$0xff]
    %v389 = vld [vmem:[#allocation5 + $0x128] sm:$0xff]
    %v390 = vld [vmem:[#allocation5 + $0x130] sm:$0xff]
    %v391 = vld [vmem:[#allocation5 + $0x138] sm:$0xff]
    %v392 = vld [vmem:[%s5] sm:$0x1f]
    %v394 = vperm.slane %v392, 0
    %v395 = vperm.slane %v392, 1
    %v396 = vperm.slane %v392, 2
    %v397 = vperm.slane %v392, 3
    %v398 = vperm.slane %v392, 4
    %vm404 = vcmask 523264
    %v406 = vsel %vm404, %v344, 0
    %v409 = vsel %vm404, %v345, 0
    %v412 = vsel %vm404, %v346, 0
    %v415 = vsel %vm404, %v347, 0
    %v418 = vsel %vm404, %v348, 0
    %v421 = vsel %vm404, %v349, 0
    %v424 = vsel %vm404, %v350, 0
    %v427 = vsel %vm404, %v351, 0
    %429 = vmatpush.msra.mxu0 0.0
    %430 = vmatpush.msra.mxu0 0.0
    %431 = vmatpush.msra.mxu0 0.0
    %432 = vmatpush.msra.mxu0 0.0
    %433 = vmatpush.msra.mxu0 0.0
    %434 = vmatpush.msra.mxu0 0.0
    %435 = vmatpush.msra.mxu0 0.0
    %436 = vmatpush.msra.mxu0 0.0
    %437 = vmatpush.msra.mxu0 %v387
    %438 = vmatpush.msra.mxu0 %v382
    %439 = vmatpush.msra.mxu0 %v377
    %440 = vmatpush.msra.mxu0 %v372
    %441 = vmatpush.msra.mxu0 %v367
    %442 = vmatpush.msra.mxu0 %v362
    %443 = vmatpush.msra.mxu0 %v357
    %444 = vmatpush.msra.mxu0 %v352
    %445 = vmatmul.f32.gmra.mxu0 %v406
    %v446 = vpop.f32.mrf.mxu0
    %v447 = vadd.f32 %v394, %v446
    %448 = vmatmul.f32.gmra.mxu0 %v409
    %v449 = vpop.f32.mrf.mxu0
    %v450 = vadd.f32 %v394, %v449
    %451 = vmatmul.f32.gmra.mxu0 %v412
    %v452 = vpop.f32.mrf.mxu0
    %v453 = vadd.f32 %v394, %v452
    %454 = vmatmul.f32.gmra.mxu0 %v415
    %v455 = vpop.f32.mrf.mxu0
    %v456 = vadd.f32 %v394, %v455
    %457 = vmatmul.f32.gmra.mxu0 %v418
    %v458 = vpop.f32.mrf.mxu0
    %v459 = vadd.f32 %v394, %v458
    %460 = vmatmul.f32.gmra.mxu0 %v421
    %v461 = vpop.f32.mrf.mxu0
    %v462 = vadd.f32 %v394, %v461
    %463 = vmatmul.f32.gmra.mxu0 %v424
    %v464 = vpop.f32.mrf.mxu0
    %v465 = vadd.f32 %v394, %v464
    %466 = vmatmul.f32.gmra.mxu0 %v427
    %v467 = vpop.f32.mrf.mxu0
    %v468 = vadd.f32 %v394, %v467
    %469 = vdwg.mxu0
    %470 = vmatpush.msra.mxu0 0.0
    %471 = vmatpush.msra.mxu0 0.0
    %472 = vmatpush.msra.mxu0 0.0
    %473 = vmatpush.msra.mxu0 0.0
    %474 = vmatpush.msra.mxu0 0.0
    %475 = vmatpush.msra.mxu0 0.0
    %476 = vmatpush.msra.mxu0 0.0
    %477 = vmatpush.msra.mxu0 0.0
    %478 = vmatpush.msra.mxu0 %v388
    %479 = vmatpush.msra.mxu0 %v383
    %480 = vmatpush.msra.mxu0 %v378
    %481 = vmatpush.msra.mxu0 %v373
    %482 = vmatpush.msra.mxu0 %v368
    %483 = vmatpush.msra.mxu0 %v363
    %484 = vmatpush.msra.mxu0 %v358
    %485 = vmatpush.msra.mxu0 %v353
    %486 = vmatmul.f32.gmra.mxu0 %v406
    %v487 = vpop.f32.mrf.mxu0
    %v488 = vadd.f32 %v395, %v487
    %489 = vmatmul.f32.gmra.mxu0 %v409
    %v490 = vpop.f32.mrf.mxu0
    %v491 = vadd.f32 %v395, %v490
    %492 = vmatmul.f32.gmra.mxu0 %v412
    %v493 = vpop.f32.mrf.mxu0
    %v494 = vadd.f32 %v395, %v493
    %495 = vmatmul.f32.gmra.mxu0 %v415
    %v496 = vpop.f32.mrf.mxu0
    %v497 = vadd.f32 %v395, %v496
    %498 = vmatmul.f32.gmra.mxu0 %v418
    %v499 = vpop.f32.mrf.mxu0
    %v500 = vadd.f32 %v395, %v499
    %501 = vmatmul.f32.gmra.mxu0 %v421
    %v502 = vpop.f32.mrf.mxu0
    %v503 = vadd.f32 %v395, %v502
    %504 = vmatmul.f32.gmra.mxu0 %v424
    %v505 = vpop.f32.mrf.mxu0
    %v506 = vadd.f32 %v395, %v505
    %507 = vmatmul.f32.gmra.mxu0 %v427
    %v508 = vpop.f32.mrf.mxu0
    %v509 = vadd.f32 %v395, %v508
    %510 = vdwg.mxu0
    %511 = vmatpush.msra.mxu0 0.0
    %512 = vmatpush.msra.mxu0 0.0
    %513 = vmatpush.msra.mxu0 0.0
    %514 = vmatpush.msra.mxu0 0.0
    %515 = vmatpush.msra.mxu0 0.0
    %516 = vmatpush.msra.mxu0 0.0
    %517 = vmatpush.msra.mxu0 0.0
    %518 = vmatpush.msra.mxu0 0.0
    %519 = vmatpush.msra.mxu0 %v389
    %520 = vmatpush.msra.mxu0 %v384
    %521 = vmatpush.msra.mxu0 %v379
    %522 = vmatpush.msra.mxu0 %v374
    %523 = vmatpush.msra.mxu0 %v369
    %524 = vmatpush.msra.mxu0 %v364
    %525 = vmatpush.msra.mxu0 %v359
    %526 = vmatpush.msra.mxu0 %v354
    %527 = vmatmul.f32.gmra.mxu0 %v406
    %v528 = vpop.f32.mrf.mxu0
    %v529 = vadd.f32 %v396, %v528
    %530 = vmatmul.f32.gmra.mxu0 %v409
    %v531 = vpop.f32.mrf.mxu0
    %v532 = vadd.f32 %v396, %v531
    %533 = vmatmul.f32.gmra.mxu0 %v412
    %v534 = vpop.f32.mrf.mxu0
    %v535 = vadd.f32 %v396, %v534
    %536 = vmatmul.f32.gmra.mxu0 %v415
    %v537 = vpop.f32.mrf.mxu0
    %v538 = vadd.f32 %v396, %v537
    %539 = vmatmul.f32.gmra.mxu0 %v418
    %v540 = vpop.f32.mrf.mxu0
    %v541 = vadd.f32 %v396, %v540
    %542 = vmatmul.f32.gmra.mxu0 %v421
    %v543 = vpop.f32.mrf.mxu0
    %v544 = vadd.f32 %v396, %v543
    %545 = vmatmul.f32.gmra.mxu0 %v424
    %v546 = vpop.f32.mrf.mxu0
    %v547 = vadd.f32 %v396, %v546
    %548 = vmatmul.f32.gmra.mxu0 %v427
    %v549 = vpop.f32.mrf.mxu0
    %v550 = vadd.f32 %v396, %v549
    %551 = vdwg.mxu0
    %552 = vmatpush.msra.mxu0 0.0
    %553 = vmatpush.msra.mxu0 0.0
    %554 = vmatpush.msra.mxu0 0.0
    %555 = vmatpush.msra.mxu0 0.0
    %556 = vmatpush.msra.mxu0 0.0
    %557 = vmatpush.msra.mxu0 0.0
    %558 = vmatpush.msra.mxu0 0.0
    %559 = vmatpush.msra.mxu0 0.0
    %560 = vmatpush.msra.mxu0 %v390
    %561 = vmatpush.msra.mxu0 %v385
    %562 = vmatpush.msra.mxu0 %v380
    %563 = vmatpush.msra.mxu0 %v375
    %564 = vmatpush.msra.mxu0 %v370
    %565 = vmatpush.msra.mxu0 %v365
    %566 = vmatpush.msra.mxu0 %v360
    %567 = vmatpush.msra.mxu0 %v355
    %568 = vmatmul.f32.gmra.mxu0 %v406
    %v569 = vpop.f32.mrf.mxu0
    %v570 = vadd.f32 %v397, %v569
    %571 = vmatmul.f32.gmra.mxu0 %v409
    %v572 = vpop.f32.mrf.mxu0
    %v573 = vadd.f32 %v397, %v572
    %574 = vmatmul.f32.gmra.mxu0 %v412
    %v575 = vpop.f32.mrf.mxu0
    %v576 = vadd.f32 %v397, %v575
    %577 = vmatmul.f32.gmra.mxu0 %v415
    %v578 = vpop.f32.mrf.mxu0
    %v579 = vadd.f32 %v397, %v578
    %580 = vmatmul.f32.gmra.mxu0 %v418
    %v581 = vpop.f32.mrf.mxu0
    %v582 = vadd.f32 %v397, %v581
    %583 = vmatmul.f32.gmra.mxu0 %v421
    %v584 = vpop.f32.mrf.mxu0
    %v585 = vadd.f32 %v397, %v584
    %586 = vmatmul.f32.gmra.mxu0 %v424
    %v587 = vpop.f32.mrf.mxu0
    %v588 = vadd.f32 %v397, %v587
    %589 = vmatmul.f32.gmra.mxu0 %v427
    %v590 = vpop.f32.mrf.mxu0
    %v591 = vadd.f32 %v397, %v590
    %592 = vdwg.mxu0
    %593 = vmatpush.msra.mxu0 0.0
    %594 = vmatpush.msra.mxu0 0.0
    %595 = vmatpush.msra.mxu0 0.0
    %596 = vmatpush.msra.mxu0 0.0
    %597 = vmatpush.msra.mxu0 0.0
    %598 = vmatpush.msra.mxu0 0.0
    %599 = vmatpush.msra.mxu0 0.0
    %600 = vmatpush.msra.mxu0 0.0
    %601 = vmatpush.msra.mxu0 %v391
    %602 = vmatpush.msra.mxu0 %v386
    %603 = vmatpush.msra.mxu0 %v381
    %604 = vmatpush.msra.mxu0 %v376
    %605 = vmatpush.msra.mxu0 %v371
    %606 = vmatpush.msra.mxu0 %v366
    %607 = vmatpush.msra.mxu0 %v361
    %608 = vmatpush.msra.mxu0 %v356
    %609 = vmatmul.f32.gmra.mxu0 %v406
    %v610 = vpop.f32.mrf.mxu0
    %v611 = vadd.f32 %v398, %v610
    %612 = vmatmul.f32.gmra.mxu0 %v409
    %v613 = vpop.f32.mrf.mxu0
    %v614 = vadd.f32 %v398, %v613
    %615 = vmatmul.f32.gmra.mxu0 %v412
    %v616 = vpop.f32.mrf.mxu0
    %v617 = vadd.f32 %v398, %v616
    %618 = vmatmul.f32.gmra.mxu0 %v415
    %v619 = vpop.f32.mrf.mxu0
    %v620 = vadd.f32 %v398, %v619
    %621 = vmatmul.f32.gmra.mxu0 %v418
    %v622 = vpop.f32.mrf.mxu0
    %v623 = vadd.f32 %v398, %v622
    %624 = vmatmul.f32.gmra.mxu0 %v421
    %v625 = vpop.f32.mrf.mxu0
    %v626 = vadd.f32 %v398, %v625
    %627 = vmatmul.f32.gmra.mxu0 %v424
    %v628 = vpop.f32.mrf.mxu0
    %v629 = vadd.f32 %v398, %v628
    %630 = vmatmul.f32.gmra.mxu0 %v427
    %v631 = vpop.f32.mrf.mxu0
    %v632 = vadd.f32 %v398, %v631
    %633 = vdwg.mxu0
    %v634 = vmul.f32 %v157, %v447
    %v635 = vmul.f32 %v198, %v488
    %v636 = vmul.f32 %v239, %v529
    %v637 = vmul.f32 %v280, %v570
    %v638 = vmul.f32 %v321, %v611
    %v639 = vmul.f32 %v160, %v450
    %v640 = vmul.f32 %v201, %v491
    %v641 = vmul.f32 %v242, %v532
    %v642 = vmul.f32 %v283, %v573
    %v643 = vmul.f32 %v324, %v614
    %v644 = vmul.f32 %v163, %v453
    %v645 = vmul.f32 %v204, %v494
    %v646 = vmul.f32 %v245, %v535
    %v647 = vmul.f32 %v286, %v576
    %v648 = vmul.f32 %v327, %v617
    %v649 = vmul.f32 %v166, %v456
    %v650 = vmul.f32 %v207, %v497
    %v651 = vmul.f32 %v248, %v538
    %v652 = vmul.f32 %v289, %v579
    %v653 = vmul.f32 %v330, %v620
    %v654 = vmul.f32 %v169, %v459
    %v655 = vmul.f32 %v210, %v500
    %v656 = vmul.f32 %v251, %v541
    %v657 = vmul.f32 %v292, %v582
    %v658 = vmul.f32 %v333, %v623
    %v659 = vmul.f32 %v172, %v462
    %v660 = vmul.f32 %v213, %v503
    %v661 = vmul.f32 %v254, %v544
    %v662 = vmul.f32 %v295, %v585
    %v663 = vmul.f32 %v336, %v626
    %v664 = vmul.f32 %v175, %v465
    %v665 = vmul.f32 %v216, %v506
    %v666 = vmul.f32 %v257, %v547
    %v667 = vmul.f32 %v298, %v588
    %v668 = vmul.f32 %v339, %v629
    %v669 = vmul.f32 %v178, %v468
    %v670 = vmul.f32 %v219, %v509
    %v671 = vmul.f32 %v260, %v550
    %v672 = vmul.f32 %v301, %v591
    %v673 = vmul.f32 %v342, %v632
    %v674 = vld [vmem:[#allocation7] sm:$0xff]
    %v675 = vld [vmem:[#allocation7 + $0x8] sm:$0xff]
    %v676 = vld [vmem:[#allocation7 + $0x10] sm:$0xff]
    %v677 = vld [vmem:[#allocation7 + $0x18] sm:$0xff]
    %v678 = vld [vmem:[#allocation7 + $0x20] sm:$0xff]
    %v679 = vld [vmem:[#allocation7 + $0x28] sm:$0xff]
    %v680 = vld [vmem:[#allocation7 + $0x30] sm:$0xff]
    %v681 = vld [vmem:[#allocation7 + $0x38] sm:$0xff]
    %v682 = vld [vmem:[#allocation7 + $0x40] sm:$0xff]
    %v683 = vld [vmem:[#allocation7 + $0x48] sm:$0xff]
    %v684 = vld [vmem:[#allocation7 + $0x50] sm:$0xff]
    %v685 = vld [vmem:[#allocation7 + $0x58] sm:$0xff]
    %v686 = vld [vmem:[#allocation7 + $0x60] sm:$0xff]
    %v687 = vld [vmem:[#allocation7 + $0x68] sm:$0xff]
    %v688 = vld [vmem:[#allocation7 + $0x70] sm:$0xff]
    %v689 = vld [vmem:[#allocation7 + $0x78] sm:$0xff]
    %v690 = vld [vmem:[#allocation7 + $0x80] sm:$0xff]
    %v691 = vld [vmem:[#allocation7 + $0x88] sm:$0xff]
    %v692 = vld [vmem:[#allocation7 + $0x90] sm:$0xff]
    %v693 = vld [vmem:[#allocation7 + $0x98] sm:$0xff]
    %v694 = vld [vmem:[#allocation7 + $0xa0] sm:$0xff]
    %v695 = vld [vmem:[#allocation7 + $0xa8] sm:$0xff]
    %v696 = vld [vmem:[#allocation7 + $0xb0] sm:$0xff]
    %v697 = vld [vmem:[#allocation7 + $0xb8] sm:$0xff]
    %v698 = vld [vmem:[#allocation7 + $0xc0] sm:$0xff]
    %v699 = vld [vmem:[#allocation7 + $0xc8] sm:$0xff]
    %v700 = vld [vmem:[#allocation7 + $0xd0] sm:$0xff]
    %v701 = vld [vmem:[#allocation7 + $0xd8] sm:$0xff]
    %v702 = vld [vmem:[#allocation7 + $0xe0] sm:$0xff]
    %v703 = vld [vmem:[#allocation7 + $0xe8] sm:$0xff]
    %v704 = vld [vmem:[#allocation7 + $0xf0] sm:$0xff]
    %v705 = vld [vmem:[#allocation7 + $0xf8] sm:$0xff]
    %v706 = vld [vmem:[#allocation7 + $0x100] sm:$0xff]
    %v707 = vld [vmem:[#allocation7 + $0x108] sm:$0xff]
    %v708 = vld [vmem:[#allocation7 + $0x110] sm:$0xff]
    %v709 = vld [vmem:[#allocation7 + $0x118] sm:$0xff]
    %v710 = vld [vmem:[#allocation7 + $0x120] sm:$0xff]
    %v711 = vld [vmem:[#allocation7 + $0x128] sm:$0xff]
    %v712 = vld [vmem:[#allocation7 + $0x130] sm:$0xff]
    %v713 = vld [vmem:[#allocation7 + $0x138] sm:$0xff]
    %v714 = vld [vmem:[#allocation7 + $0x140] sm:$0xff]
    %v715 = vld [vmem:[#allocation7 + $0x148] sm:$0xff]
    %v716 = vld [vmem:[#allocation7 + $0x150] sm:$0xff]
    %v717 = vld [vmem:[#allocation7 + $0x158] sm:$0xff]
    %v718 = vld [vmem:[#allocation7 + $0x160] sm:$0xff]
    %v719 = vld [vmem:[#allocation7 + $0x168] sm:$0xff]
    %v720 = vld [vmem:[#allocation7 + $0x170] sm:$0xff]
    %v721 = vld [vmem:[#allocation7 + $0x178] sm:$0xff]
    %v722 = vld [vmem:[#allocation7 + $0x180] sm:$0xff]
    %v723 = vld [vmem:[#allocation7 + $0x188] sm:$0xff]
    %v724 = vld [vmem:[#allocation7 + $0x190] sm:$0xff]
    %v725 = vld [vmem:[#allocation7 + $0x198] sm:$0xff]
    %v726 = vld [vmem:[#allocation7 + $0x1a0] sm:$0xff]
    %v727 = vld [vmem:[#allocation7 + $0x1a8] sm:$0xff]
    %v728 = vld [vmem:[#allocation7 + $0x1b0] sm:$0xff]
    %v729 = vld [vmem:[#allocation7 + $0x1b8] sm:$0xff]
    %v730 = vld [vmem:[#allocation7 + $0x1c0] sm:$0xff]
    %v731 = vld [vmem:[#allocation7 + $0x1c8] sm:$0xff]
    %v732 = vld [vmem:[#allocation7 + $0x1d0] sm:$0xff]
    %v733 = vld [vmem:[#allocation7 + $0x1d8] sm:$0xff]
    %v734 = vld [vmem:[#allocation7 + $0x1e0] sm:$0xff]
    %v735 = vld [vmem:[#allocation7 + $0x1e8] sm:$0xff]
    %v736 = vld [vmem:[#allocation7 + $0x1f0] sm:$0xff]
    %v737 = vld [vmem:[#allocation7 + $0x1f8] sm:$0xff]
    %v738 = vld [vmem:[#allocation7 + $0x200] sm:$0xff]
    %v739 = vld [vmem:[#allocation7 + $0x208] sm:$0xff]
    %v740 = vld [vmem:[#allocation7 + $0x210] sm:$0xff]
    %v741 = vld [vmem:[#allocation7 + $0x218] sm:$0xff]
    %v742 = vld [vmem:[#allocation7 + $0x220] sm:$0xff]
    %v743 = vld [vmem:[#allocation7 + $0x228] sm:$0xff]
    %v744 = vld [vmem:[#allocation7 + $0x230] sm:$0xff]
    %v745 = vld [vmem:[#allocation7 + $0x238] sm:$0xff]
    %v746 = vld [vmem:[#allocation7 + $0x240] sm:$0xff]
    %v747 = vld [vmem:[#allocation7 + $0x248] sm:$0xff]
    %v748 = vld [vmem:[#allocation7 + $0x250] sm:$0xff]
    %v749 = vld [vmem:[#allocation7 + $0x258] sm:$0xff]
    %v750 = vld [vmem:[#allocation7 + $0x260] sm:$0xff]
    %v751 = vld [vmem:[#allocation7 + $0x268] sm:$0xff]
    %v752 = vld [vmem:[#allocation7 + $0x270] sm:$0xff]
    %v753 = vld [vmem:[#allocation7 + $0x278] sm:$0xff]
    %754 = vmatpush.msra.mxu0 %v689
    %755 = vmatpush.msra.mxu0 %v688
    %756 = vmatpush.msra.mxu0 %v687
    %757 = vmatpush.msra.mxu0 %v686
    %758 = vmatpush.msra.mxu0 %v685
    %759 = vmatpush.msra.mxu0 %v684
    %760 = vmatpush.msra.mxu0 %v683
    %761 = vmatpush.msra.mxu0 %v682
    %762 = vmatpush.msra.mxu0 %v681
    %763 = vmatpush.msra.mxu0 %v680
    %764 = vmatpush.msra.mxu0 %v679
    %765 = vmatpush.msra.mxu0 %v678
    %766 = vmatpush.msra.mxu0 %v677
    %767 = vmatpush.msra.mxu0 %v676
    %768 = vmatpush.msra.mxu0 %v675
    %769 = vmatpush.msra.mxu0 %v674
    %770 = vmatmul.f32.gmra.mxu0 %v634
    %v771 = vpop.f32.mrf.mxu0
    %v772 = vadd.f32 0.0, %v771
    %773 = vmatmul.f32.gmra.mxu0 %v639
    %v774 = vpop.f32.mrf.mxu0
    %v775 = vadd.f32 0.0, %v774
    %776 = vmatmul.f32.gmra.mxu0 %v644
    %v777 = vpop.f32.mrf.mxu0
    %v778 = vadd.f32 0.0, %v777
    %779 = vmatmul.f32.gmra.mxu0 %v649
    %v780 = vpop.f32.mrf.mxu0
    %v781 = vadd.f32 0.0, %v780
    %782 = vmatmul.f32.gmra.mxu0 %v654
    %v783 = vpop.f32.mrf.mxu0
    %v784 = vadd.f32 0.0, %v783
    %785 = vmatmul.f32.gmra.mxu0 %v659
    %v786 = vpop.f32.mrf.mxu0
    %v787 = vadd.f32 0.0, %v786
    %788 = vmatmul.f32.gmra.mxu0 %v664
    %v789 = vpop.f32.mrf.mxu0
    %v790 = vadd.f32 0.0, %v789
    %791 = vmatmul.f32.gmra.mxu0 %v669
    %v792 = vpop.f32.mrf.mxu0
    %v793 = vadd.f32 0.0, %v792
    %794 = vdwg.mxu0
    %795 = vmatpush.msra.mxu0 %v705
    %796 = vmatpush.msra.mxu0 %v704
    %797 = vmatpush.msra.mxu0 %v703
    %798 = vmatpush.msra.mxu0 %v702
    %799 = vmatpush.msra.mxu0 %v701
    %800 = vmatpush.msra.mxu0 %v700
    %801 = vmatpush.msra.mxu0 %v699
    %802 = vmatpush.msra.mxu0 %v698
    %803 = vmatpush.msra.mxu0 %v697
    %804 = vmatpush.msra.mxu0 %v696
    %805 = vmatpush.msra.mxu0 %v695
    %806 = vmatpush.msra.mxu0 %v694
    %807 = vmatpush.msra.mxu0 %v693
    %808 = vmatpush.msra.mxu0 %v692
    %809 = vmatpush.msra.mxu0 %v691
    %810 = vmatpush.msra.mxu0 %v690
    %811 = vmatmul.f32.gmra.mxu0 %v635
    %v812 = vpop.f32.mrf.mxu0
    %v813 = vadd.f32 %v772, %v812
    %814 = vmatmul.f32.gmra.mxu0 %v640
    %v815 = vpop.f32.mrf.mxu0
    %v816 = vadd.f32 %v775, %v815
    %817 = vmatmul.f32.gmra.mxu0 %v645
    %v818 = vpop.f32.mrf.mxu0
    %v819 = vadd.f32 %v778, %v818
    %820 = vmatmul.f32.gmra.mxu0 %v650
    %v821 = vpop.f32.mrf.mxu0
    %v822 = vadd.f32 %v781, %v821
    %823 = vmatmul.f32.gmra.mxu0 %v655
    %v824 = vpop.f32.mrf.mxu0
    %v825 = vadd.f32 %v784, %v824
    %826 = vmatmul.f32.gmra.mxu0 %v660
    %v827 = vpop.f32.mrf.mxu0
    %v828 = vadd.f32 %v787, %v827
    %829 = vmatmul.f32.gmra.mxu0 %v665
    %v830 = vpop.f32.mrf.mxu0
    %v831 = vadd.f32 %v790, %v830
    %832 = vmatmul.f32.gmra.mxu0 %v670
    %v833 = vpop.f32.mrf.mxu0
    %v834 = vadd.f32 %v793, %v833
    %835 = vdwg.mxu0
    %836 = vmatpush.msra.mxu0 %v721
    %837 = vmatpush.msra.mxu0 %v720
    %838 = vmatpush.msra.mxu0 %v719
    %839 = vmatpush.msra.mxu0 %v718
    %840 = vmatpush.msra.mxu0 %v717
    %841 = vmatpush.msra.mxu0 %v716
    %842 = vmatpush.msra.mxu0 %v715
    %843 = vmatpush.msra.mxu0 %v714
    %844 = vmatpush.msra.mxu0 %v713
    %845 = vmatpush.msra.mxu0 %v712
    %846 = vmatpush.msra.mxu0 %v711
    %847 = vmatpush.msra.mxu0 %v710
    %848 = vmatpush.msra.mxu0 %v709
    %849 = vmatpush.msra.mxu0 %v708
    %850 = vmatpush.msra.mxu0 %v707
    %851 = vmatpush.msra.mxu0 %v706
    %852 = vmatmul.f32.gmra.mxu0 %v636
    %v853 = vpop.f32.mrf.mxu0
    %v854 = vadd.f32 %v813, %v853
    %855 = vmatmul.f32.gmra.mxu0 %v641
    %v856 = vpop.f32.mrf.mxu0
    %v857 = vadd.f32 %v816, %v856
    %858 = vmatmul.f32.gmra.mxu0 %v646
    %v859 = vpop.f32.mrf.mxu0
    %v860 = vadd.f32 %v819, %v859
    %861 = vmatmul.f32.gmra.mxu0 %v651
    %v862 = vpop.f32.mrf.mxu0
    %v863 = vadd.f32 %v822, %v862
    %864 = vmatmul.f32.gmra.mxu0 %v656
    %v865 = vpop.f32.mrf.mxu0
    %v866 = vadd.f32 %v825, %v865
    %867 = vmatmul.f32.gmra.mxu0 %v661
    %v868 = vpop.f32.mrf.mxu0
    %v869 = vadd.f32 %v828, %v868
    %870 = vmatmul.f32.gmra.mxu0 %v666
    %v871 = vpop.f32.mrf.mxu0
    %v872 = vadd.f32 %v831, %v871
    %873 = vmatmul.f32.gmra.mxu0 %v671
    %v874 = vpop.f32.mrf.mxu0
    %v875 = vadd.f32 %v834, %v874
    %876 = vdwg.mxu0
    %877 = vmatpush.msra.mxu0 %v737
    %878 = vmatpush.msra.mxu0 %v736
    %879 = vmatpush.msra.mxu0 %v735
    %880 = vmatpush.msra.mxu0 %v734
    %881 = vmatpush.msra.mxu0 %v733
    %882 = vmatpush.msra.mxu0 %v732
    %883 = vmatpush.msra.mxu0 %v731
    %884 = vmatpush.msra.mxu0 %v730
    %885 = vmatpush.msra.mxu0 %v729
    %886 = vmatpush.msra.mxu0 %v728
    %887 = vmatpush.msra.mxu0 %v727
    %888 = vmatpush.msra.mxu0 %v726
    %889 = vmatpush.msra.mxu0 %v725
    %890 = vmatpush.msra.mxu0 %v724
    %891 = vmatpush.msra.mxu0 %v723
    %892 = vmatpush.msra.mxu0 %v722
    %893 = vmatmul.f32.gmra.mxu0 %v637
    %v894 = vpop.f32.mrf.mxu0
    %v895 = vadd.f32 %v854, %v894
    %896 = vmatmul.f32.gmra.mxu0 %v642
    %v897 = vpop.f32.mrf.mxu0
    %v898 = vadd.f32 %v857, %v897
    %899 = vmatmul.f32.gmra.mxu0 %v647
    %v900 = vpop.f32.mrf.mxu0
    %v901 = vadd.f32 %v860, %v900
    %902 = vmatmul.f32.gmra.mxu0 %v652
    %v903 = vpop.f32.mrf.mxu0
    %v904 = vadd.f32 %v863, %v903
    %905 = vmatmul.f32.gmra.mxu0 %v657
    %v906 = vpop.f32.mrf.mxu0
    %v907 = vadd.f32 %v866, %v906
    %908 = vmatmul.f32.gmra.mxu0 %v662
    %v909 = vpop.f32.mrf.mxu0
    %v910 = vadd.f32 %v869, %v909
    %911 = vmatmul.f32.gmra.mxu0 %v667
    %v912 = vpop.f32.mrf.mxu0
    %v913 = vadd.f32 %v872, %v912
    %914 = vmatmul.f32.gmra.mxu0 %v672
    %v915 = vpop.f32.mrf.mxu0
    %v916 = vadd.f32 %v875, %v915
    %917 = vdwg.mxu0
    %918 = vmatpush.msra.mxu0 %v753
    %919 = vmatpush.msra.mxu0 %v752
    %920 = vmatpush.msra.mxu0 %v751
    %921 = vmatpush.msra.mxu0 %v750
    %922 = vmatpush.msra.mxu0 %v749
    %923 = vmatpush.msra.mxu0 %v748
    %924 = vmatpush.msra.mxu0 %v747
    %925 = vmatpush.msra.mxu0 %v746
    %926 = vmatpush.msra.mxu0 %v745
    %927 = vmatpush.msra.mxu0 %v744
    %928 = vmatpush.msra.mxu0 %v743
    %929 = vmatpush.msra.mxu0 %v742
    %930 = vmatpush.msra.mxu0 %v741
    %931 = vmatpush.msra.mxu0 %v740
    %932 = vmatpush.msra.mxu0 %v739
    %933 = vmatpush.msra.mxu0 %v738
    %934 = vmatmul.f32.gmra.mxu0 %v638
    %v935 = vpop.f32.mrf.mxu0
    %v936 = vadd.f32 %v895, %v935
    %937 = vmatmul.f32.gmra.mxu0 %v643
    %v938 = vpop.f32.mrf.mxu0
    %v939 = vadd.f32 %v898, %v938
    %940 = vmatmul.f32.gmra.mxu0 %v648
    %v941 = vpop.f32.mrf.mxu0
    %v942 = vadd.f32 %v901, %v941
    %943 = vmatmul.f32.gmra.mxu0 %v653
    %v944 = vpop.f32.mrf.mxu0
    %v945 = vadd.f32 %v904, %v944
    %946 = vmatmul.f32.gmra.mxu0 %v658
    %v947 = vpop.f32.mrf.mxu0
    %v948 = vadd.f32 %v907, %v947
    %949 = vmatmul.f32.gmra.mxu0 %v663
    %v950 = vpop.f32.mrf.mxu0
    %v951 = vadd.f32 %v910, %v950
    %952 = vmatmul.f32.gmra.mxu0 %v668
    %v953 = vpop.f32.mrf.mxu0
    %v954 = vadd.f32 %v913, %v953
    %955 = vmatmul.f32.gmra.mxu0 %v673
    %v956 = vpop.f32.mrf.mxu0
    %v957 = vadd.f32 %v916, %v956
    %958 = vdwg.mxu0
    %959 = vst [vmem:[#allocation8] sm:$0xff] %v936
    %960 = vst [vmem:[#allocation8 + $0x8] sm:$0xff] %v939
    %961 = vst [vmem:[#allocation8 + $0x10] sm:$0xff] %v942
    %962 = vst [vmem:[#allocation8 + $0x18] sm:$0xff] %v945
    %963 = vst [vmem:[#allocation8 + $0x20] sm:$0xff] %v948
    %964 = vst [vmem:[#allocation8 + $0x28] sm:$0xff] %v951
    %965 = vst [vmem:[#allocation8 + $0x30] sm:$0xff] %v954
    %966 = vst [vmem:[#allocation8 + $0x38] sm:$0xff] %v957
    // Predicated region
    $region42: #{tpu_custom_call.1} parent=1 // pred_check
      _
    $region43: #{tpu_custom_call.1} parent=1 // pred_check_branch
      %968 = sbr.rel (0) target = $region45
    $region44: #{tpu_custom_call.1} parent=1 // pred_region
      %970 = vsyncadd [#allocation4], 0
      %s971 = sshll.u32 [#allocation8], 4
      %s972 = int_to_ptr.vmem [resolvable:$true] %s971
      %s973 = sshll.u32 %s7, 4
      %s974 = int_to_ptr.hbm [resolvable:$true] %s973
      %979 = dma.vmem_to_hbm [thread:$0]  %s972, 1024, %s974, [#allocation4], 128, 128, 8
    $region45: #{tpu_custom_call.1} parent=1 // pred_fallthru
      _
    // Predicated region
    $region46: #{tpu_custom_call.1} parent=1 // pred_check
      _
    $region47: #{tpu_custom_call.1} parent=1 // pred_check_branch
      %981 = sbr.rel (0) target = $region49
    $region48: #{tpu_custom_call.1} parent=1 // pred_region
      %983 = dma.done [#allocation4], 1024
    $region49: #{tpu_custom_call.1} parent=1 // pred_fallthru
      _
    %984 = vsyncpa [#allocation3], 1
    %985 = vsyncpa [#allocation6], 1
    %986 = vsyncpa [#allocation4], 1

</llo_original>
